<compile_context>
chip_gen: v5e
topology: v5e:2x2
jax: 0.10.0
libtpu: 0.0.40
codegen_flags: <defaults>
</compile_context>

<pallas_src>
import functools

import jax
import jax.numpy as jnp
from jax import lax
from jax.experimental import pallas as pl
from jax.experimental.pallas import tpu as pltpu


def _round_up(x: int, m: int) -> int:
    return ((x + m - 1) // m) * m


# ---------------------------------------------------------------------------
# Kernels
# ---------------------------------------------------------------------------
def _linear_kernel_single_k(x_ref, w_ref, b_ref, o_ref):
    """Whole reduction fits one K tile: no accumulator, no control flow."""
    # x_ref: [tm, K] bf16, w_ref: [tn, K] bf16 (PyTorch [C, D] layout),
    # b_ref: [1, tn] f32, o_ref: [tm, tn] f32.
    # NT contraction ([tm,K] x [tn,K] over dim 1) feeds the MXU directly; if a
    # bundle dump ever shows a per-tile vxpose here, pre-transpose W to [D, C]
    # once in HBM outside the jit instead.
    acc = lax.dot_general(
        x_ref[...],
        w_ref[...],
        dimension_numbers=(((1,), (1,)), ((), ())),
        preferred_element_type=jnp.float32,
    )
    o_ref[...] = (acc + b_ref[...]).astype(o_ref.dtype)


def _linear_kernel_multi_k(x_ref, w_ref, b_ref, o_ref):
    """K tiled: the f32 output block (K-invariant index) IS the accumulator."""
    k = pl.program_id(2)

    @pl.when(k == 0)
    def _():
        o_ref[...] = jnp.zeros_like(o_ref)

    o_ref[...] += lax.dot_general(
        x_ref[...],
        w_ref[...],
        dimension_numbers=(((1,), (1,)), ((), ())),
        preferred_element_type=jnp.float32,
    )

    @pl.when(k == pl.num_programs(2) - 1)
    def _():
        o_ref[...] += b_ref[...]


# ---------------------------------------------------------------------------
# Pallas forward
# ---------------------------------------------------------------------------
@functools.partial(jax.jit, static_argnames=("compute_dtype",))
def linear_pallas_forward(x, weight, bias, *, compute_dtype=jnp.bfloat16):
    """y = x @ weight.T + bias.

    x:      [B, D] float32
    weight: [C, D] float32  (PyTorch nn.Linear convention)
    bias:   [C]    float32
    returns [B, C] float32
    """
    B, D = x.shape
    C = weight.shape[0]

    # ---- tile selection (one conservative table for v5e/v6e/v7x) ----------
    # Lane-dense (x128) on C/D, sublane-aligned (x8) on B. N is rounded to a
    # 256 multiple when C allows it so each vmatmul fills the 2x256x256 MXU
    # on v6e/v7x. Worst case bf16 footprint (512,512,2048 double-buffered
    # inputs + f32 out) ~ 10 MiB -> far under the v7x 64 MiB physical VMEM.
    tm = min(512, _round_up(B, 8))
    tn = 128 if C <= 128 else min(512, _round_up(C, 256))
    # Collapse the K grid axis entirely when the reduction fits a single tile.
    tk = min(2048, _round_up(D, 128))

    B_pad = _round_up(B, tm)
    C_pad = _round_up(C, tn)
    D_pad = _round_up(D, tk)

    # v7x megacore: ensure at least one "parallel" grid axis has extent >= 2
    # so both TensorCores get work (split the batch tile if needed).
    if B_pad // tm == 1 and C_pad // tn == 1 and tm >= 16:
        tm = _round_up(tm // 2, 8)
        B_pad = _round_up(B, tm)

    grid = (B_pad // tm, C_pad // tn, D_pad // tk)
    nk = grid[2]

    # ---- operand prep: bf16 for DMA/MXU, pad only when actually unaligned --
    # (For a weight reused across many calls, pre-cast/pre-pad it once outside
    #  the jit'd forward to avoid repeating this per step.)
    x_p = x.astype(compute_dtype)
    if B_pad != B or D_pad != D:
        x_p = jnp.pad(x_p, ((0, B_pad - B), (0, D_pad - D)))
    w_p = weight.astype(compute_dtype)
    if C_pad != C or D_pad != D:
        w_p = jnp.pad(w_p, ((0, C_pad - C), (0, D_pad - D)))
    b_p = bias.astype(jnp.float32)
    if C_pad != C:
        b_p = jnp.pad(b_p, (0, C_pad - C))
    b_p = b_p.reshape(1, C_pad)

    kernel = _linear_kernel_single_k if nk == 1 else _linear_kernel_multi_k

    out = pl.pallas_call(
        kernel,
        out_shape=jax.ShapeDtypeStruct((B_pad, C_pad), jnp.float32),
        grid_spec=pl.GridSpec(
            grid=grid,
            in_specs=[
                # x tile depends on (batch, K); independent of the class axis.
                pl.BlockSpec((tm, tk), lambda i, j, k: (i, k)),
                # weight tile depends on (class, K); independent of batch axis.
                pl.BlockSpec((tn, tk), lambda i, j, k: (j, k)),
                # bias tile depends only on the class axis.
                pl.BlockSpec((1, tn), lambda i, j, k: (0, j)),
            ],
            # Output block index is constant across K -> VMEM-resident
            # f32 accumulator, written back once per (i, j) block.
            out_specs=pl.BlockSpec((tm, tn), lambda i, j, k: (i, j)),
        ),
        compiler_params=pltpu.CompilerParams(
            dimension_semantics=("parallel", "parallel", "arbitrary"),
            # Raise past the v5e 16 MiB scoped default; still well under the
            # v7x 64 MiB physical VMEM. (If profiling shows exposed K-axis DMA
            # waits, there is headroom for pipeline_mode=pl.Buffered(3).)
            vmem_limit_bytes=32 << 20,
        ),
    )(x_p, w_p, b_p)

    if B_pad != B or C_pad != C:
        out = out[:B, :C]
    return out


# Below this FLOP count a (1,1,1)-grid Pallas call is pure fixed overhead;
# let XLA fuse the tiny matmul instead.
_PALLAS_FLOP_THRESHOLD = 1 << 24


def linear_model_forward(x, weight, bias, *, compute_dtype=jnp.bfloat16):
    """LinearModel.forward with size-based dispatch (XLA for tiny problems)."""
    B, D = x.shape
    C = weight.shape[0]
    if 2 * B * C * D < _PALLAS_FLOP_THRESHOLD:
        return x @ weight.T + bias
    return linear_pallas_forward(x, weight, bias, compute_dtype=compute_dtype)


# ---------------------------------------------------------------------------
# Demo / correctness check
# ---------------------------------------------------------------------------
if __name__ == "__main__":
    def make_problem(key, batch, input_dim, num_classes):
        kx, kw, kb = jax.random.split(key, 3)
        x_raw = jax.random.normal(kx, (batch, input_dim), dtype=jnp.float32)
        # Mimic NPYDataset: L2-normalize feature rows.
        norms = jnp.linalg.norm(x_raw, axis=1, keepdims=True)
        x = x_raw / jnp.maximum(norms, 1e-10)
        # PyTorch nn.Linear default init: U(-1/sqrt(D), 1/sqrt(D)).
        bound = 1.0 / (input_dim ** 0.5)
        w = jax.random.uniform(kw, (num_classes, input_dim), jnp.float32,
                               -bound, bound)
        b = jax.random.uniform(kb, (num_classes,), jnp.float32, -bound, bound)
        return x, w, b

    key = jax.random.PRNGKey(0)
    k1, k2, k3 = jax.random.split(key, 3)

    # 1) Tiny demo shapes (module-consistent): dispatches to fused XLA.
    x, w, b = make_problem(k1, batch=8, input_dim=32, num_classes=10)
    out = jax.block_until_ready(linear_model_forward(x, w, b))
    ref = x @ w.T + b
    assert out.shape == (8, 10)
    assert jnp.allclose(out, ref, atol=1e-5, rtol=1e-5)

    # 2) Pallas path, single K step: unaligned C (272 -> 512 pad), batch axis
    #    split to extent 2 for v7x megacore.
    x, w, b = make_problem(k2, batch=512, input_dim=384, num_classes=272)
    out = jax.block_until_ready(linear_pallas_forward(x, w, b))
    ref_bf16 = (x.astype(jnp.bfloat16).astype(jnp.float32)
                @ w.astype(jnp.bfloat16).astype(jnp.float32).T + b)
    ref_f32 = x @ w.T + b
    assert out.shape == (512, 272)
    assert jnp.allclose(out, ref_bf16, atol=1e-4, rtol=1e-3)
    assert jnp.allclose(out, ref_f32, atol=5e-3, rtol=5e-2)

    # 3) Pallas path, multi-K: exercises the accumulate-into-output kernel.
    x, w, b = make_problem(k3, batch=256, input_dim=4224, num_classes=64)
    out = jax.block_until_ready(linear_pallas_forward(x, w, b))
    ref_bf16 = (x.astype(jnp.bfloat16).astype(jnp.float32)
                @ w.astype(jnp.bfloat16).astype(jnp.float32).T + b)
    assert out.shape == (256, 64)
    assert jnp.allclose(out, ref_bf16, atol=1e-4, rtol=1e-3)

    print("KERNEL_OK")
</pallas_src>

<mosaic_0001>
module attributes {stable_mosaic.version = 11 : i64} {
  func.func @_linear_kernel_single_k(%arg0: i32, %arg1: i32, %arg2: i32, %arg3: memref<256x384xbf16, #tpu.memory_space<vmem>>, %arg4: memref<512x384xbf16, #tpu.memory_space<vmem>>, %arg5: memref<1x512xf32, #tpu.memory_space<vmem>>, %arg6: memref<256x512xf32, #tpu.memory_space<vmem>>) attributes {dimension_semantics = [#tpu.dimension_semantics<parallel>, #tpu.dimension_semantics<parallel>, #tpu.dimension_semantics<arbitrary>], iteration_bounds = array<i64: 2, 1, 1>, scalar_prefetch = 0 : i64, scratch_operands = 0 : i64, tpu.core_type = #tpu.core_type<tc>, window_params = [{transform_indices = @transform_0, window_bounds = array<i64: 256, 384>}, {transform_indices = @transform_1, window_bounds = array<i64: 512, 384>}, {transform_indices = @transform_2, window_bounds = array<i64: 1, 512>}, {transform_indices = @transform_3, window_bounds = array<i64: 256, 512>}]} {
    %c0 = arith.constant 0 : index
    %c0_0 = arith.constant 0 : index
    %0 = vector.load %arg3[%c0, %c0_0] : memref<256x384xbf16, #tpu.memory_space<vmem>>, vector<256x384xbf16>
    %c0_1 = arith.constant 0 : index
    %c0_2 = arith.constant 0 : index
    %1 = vector.load %arg4[%c0_1, %c0_2] : memref<512x384xbf16, #tpu.memory_space<vmem>>, vector<512x384xbf16>
    %cst = arith.constant dense<0.000000e+00> : vector<256x512xf32>
    %2 = tpu.matmul %0, %1, %cst {dimension_numbers = #tpu.dot_dimension_numbers<[1], [1], [0], [0], [0, 0, 1, 0], [], []>} : vector<256x384xbf16>, vector<512x384xbf16>, vector<256x512xf32> -> vector<256x512xf32>
    %c0_3 = arith.constant 0 : index
    %c0_4 = arith.constant 0 : index
    %3 = vector.load %arg5[%c0_3, %c0_4] : memref<1x512xf32, #tpu.memory_space<vmem>>, vector<1x512xf32>
    %4 = vector.broadcast %3 : vector<1x512xf32> to vector<256x512xf32>
    %5 = arith.addf %2, %4 : vector<256x512xf32>
    %c0_5 = arith.constant 0 : index
    %c0_6 = arith.constant 0 : index
    %6 = vector.load %arg6[%c0_5, %c0_6] : memref<256x512xf32, #tpu.memory_space<vmem>>, vector<256x512xf32>
    tpu.vector_store %arg6[%c0_5, %c0_6], %5 {strides = array<i32>} : memref<256x512xf32, #tpu.memory_space<vmem>>, vector<256x512xf32>,
    return
  }
  func.func @transform_0(%arg0: i32, %arg1: i32, %arg2: i32) -> (i32, i32) {
    %c0_i32 = arith.constant 0 : i32
    return %arg0, %arg2 : i32, i32
  }
  func.func @transform_1(%arg0: i32, %arg1: i32, %arg2: i32) -> (i32, i32) {
    %c0_i32 = arith.constant 0 : i32
    return %arg1, %arg2 : i32, i32
  }
  func.func @transform_2(%arg0: i32, %arg1: i32, %arg2: i32) -> (i32, i32) {
    %c0_i32 = arith.constant 0 : i32
    %c0_i32_0 = arith.constant 0 : i32
    return %c0_i32, %arg1 : i32, i32
  }
  func.func @transform_3(%arg0: i32, %arg1: i32, %arg2: i32) -> (i32, i32) {
    %c0_i32 = arith.constant 0 : i32
    return %arg0, %arg1 : i32, i32
  }
}

</mosaic_0001>

<llo_original>
// kernel: linear_pallas_forward.1
$region0: #{linear_pallas_forward.1}
  #allocation0 [shape = 'u32[]', space=smem, size = 0x4, offset = 0x4, fixed_abs, tag = 'smem constant byte address 0x4 - core index']
  #allocation1 [shape = 'u32[72,128]{1,0:T(1,128)}', space=vmem, size = 0x9000, scoped, tag = 'internal scratch']
  %s0 = inlined_call_operand.vmem [shape: bf16[512,384], index: 0, kind: input, shape index: {}]
  %s1 = inlined_call_operand.vmem [shape: bf16[512,384], index: 1, kind: input, shape index: {}]
  %s2 = inlined_call_operand.vmem [shape: f32[1,512], index: 2, kind: input, shape index: {}]
  %s3 = inlined_call_operand.vmem [shape: f32[512,512], index: 3, kind: output, shape index: {}]
  %s4 = sld [smem:[#allocation0]]
  $region45: #{linear_pallas_forward.1} parent=0
    _
  %s6 = ssub.s32 1, %s4
  %s7 = scalar_select 0, %s6, %s4
  loop: start=0, step=1, limit=4
  $region2: #{linear_pallas_forward.1} parent=0 // loop_pre_header
    _
  $region3: #{linear_pallas_forward.1} parent=0 // loop_header
    %s9 = sphi 0, %s13
    %p10 = scmp.ge.s32.totalorder %s9, 4
    %s16 = sphi 0, %s35
    %s17 = sphi 0, %s31
    %s18 = sphi 0, %s27
    %s19 = sphi 0, %s16
    %s20 = sphi 0, %s17
    %s21 = sphi 0, %s18
    %s22 = sphi 0, %s19
    %s23 = sphi 0, %s20
    %s24 = sphi 0, %s21
    %s40 = sphi 0, %s42
    %s43 = sphi 0, %s40
    %s44 = sphi 0, %s43
    %s60 = sphi 0, %s44
    %s68 = sphi 0, %s70
    %s71 = sphi 0, %s68
    %s72 = sphi 0, %s71
    %s88 = sphi 0, %s72
    %s94 = sphi 0, %s96
    %s97 = sphi 0, %s94
    %s98 = sphi 0, %s97
    %s114 = sphi 0, %s98
    %s122 = sphi 0, %s124
    %s125 = sphi 0, %s122
    %s126 = sphi 0, %s125
    %s142 = sphi 0, %s126
  $region4: #{linear_pallas_forward.1} parent=0 // loop_header_branch
    %12 = sbr.rel (%p10) target = $region8
  $region5: #{linear_pallas_forward.1} parent=0 // loop_body
    %s14 = ssub.s32 %s9, 1
    %s15 = ssub.s32 %s9, 2
    %s25 = sadd.s32 1, %s18
    %p26 = scmp.ge.s32.totalorder %s25, 1
    %s27 = scalar_select %p26, 0, %s25
    %s28 = sadd.s32 1, %s17
    %s29 = scalar_select %p26, %s28, %s17
    %p30 = scmp.ge.s32.totalorder %s29, 1
    %s31 = scalar_select %p30, 0, %s29
    %s32 = sadd.s32 1, %s16
    %s33 = scalar_select %p30, %s32, %s16
    %p34 = scmp.ge.s32.totalorder %s33, 2
    %s35 = scalar_select %p34, 0, %s33
    %s36 = ssub.s32 %s16, %s35
    %s37 = ssub.s32 %s18, %s27
    %s38 = sor.u32 %s36, %s37
    %p39 = scmp.eq.s32.totalorder %s38, 0
    %s41 = sadd.s32 %s40, 1
    %s42 = scalar_select %p39, %s40, %s41
    %p45 = pneg %p39
    %p46 = scmp.eq.s32.totalorder %s9, 1
    %p47 = por %p45, %p46
    %p48 = scmp.ne.s32.totalorder %s40, %s43
    %p49 = scmp.eq.s32.totalorder %s9, 0
    %p50 = por %p48, %p49
    %p51 = scmp.ne.s32.totalorder %s40, %s43
    %p52 = scmp.eq.s32.totalorder %s14, 1
    %p53 = por %p51, %p52
    %p54 = scmp.ne.s32.totalorder %s43, %s44
    %p55 = scmp.eq.s32.totalorder %s14, 0
    %p56 = por %p54, %p55
    %p57 = scmp.ne.s32.totalorder %s43, %s44
    %p58 = scmp.eq.s32.totalorder %s15, 1
    %p59 = por %p57, %p58
    %p61 = scmp.ne.s32.totalorder %s44, %s60
    %p62 = scmp.eq.s32.totalorder %s15, 0
    %p63 = por %p61, %p62
    %s64 = ssub.s32 %s17, %s31
    %s65 = ssub.s32 %s18, %s27
    %s66 = sor.u32 %s64, %s65
    %p67 = scmp.eq.s32.totalorder %s66, 0
    %s69 = sadd.s32 %s68, 1
    %s70 = scalar_select %p67, %s68, %s69
    %p73 = pneg %p67
    %p74 = scmp.eq.s32.totalorder %s9, 1
    %p75 = por %p73, %p74
    %p76 = scmp.ne.s32.totalorder %s68, %s71
    %p77 = scmp.eq.s32.totalorder %s9, 0
    %p78 = por %p76, %p77
    %p79 = scmp.ne.s32.totalorder %s68, %s71
    %p80 = scmp.eq.s32.totalorder %s14, 1
    %p81 = por %p79, %p80
    %p82 = scmp.ne.s32.totalorder %s71, %s72
    %p83 = scmp.eq.s32.totalorder %s14, 0
    %p84 = por %p82, %p83
    %p85 = scmp.ne.s32.totalorder %s71, %s72
    %p86 = scmp.eq.s32.totalorder %s15, 1
    %p87 = por %p85, %p86
    %p89 = scmp.ne.s32.totalorder %s72, %s88
    %p90 = scmp.eq.s32.totalorder %s15, 0
    %p91 = por %p89, %p90
    %s92 = ssub.s32 %s17, %s31
    %p93 = scmp.eq.s32.totalorder %s92, 0
    %s95 = sadd.s32 %s94, 1
    %s96 = scalar_select %p93, %s94, %s95
    %p99 = pneg %p93
    %p100 = scmp.eq.s32.totalorder %s9, 1
    %p101 = por %p99, %p100
    %p102 = scmp.ne.s32.totalorder %s94, %s97
    %p103 = scmp.eq.s32.totalorder %s9, 0
    %p104 = por %p102, %p103
    %p105 = scmp.ne.s32.totalorder %s94, %s97
    %p106 = scmp.eq.s32.totalorder %s14, 1
    %p107 = por %p105, %p106
    %p108 = scmp.ne.s32.totalorder %s97, %s98
    %p109 = scmp.eq.s32.totalorder %s14, 0
    %p110 = por %p108, %p109
    %p111 = scmp.ne.s32.totalorder %s97, %s98
    %p112 = scmp.eq.s32.totalorder %s15, 1
    %p113 = por %p111, %p112
    %p115 = scmp.ne.s32.totalorder %s98, %s114
    %p116 = scmp.eq.s32.totalorder %s15, 0
    %p117 = por %p115, %p116
    %s118 = ssub.s32 %s16, %s35
    %s119 = ssub.s32 %s17, %s31
    %s120 = sor.u32 %s118, %s119
    %p121 = scmp.eq.s32.totalorder %s120, 0
    %s123 = sadd.s32 %s122, 1
    %s124 = scalar_select %p121, %s122, %s123
    %p127 = pneg %p121
    %p128 = scmp.eq.s32.totalorder %s9, 1
    %p129 = por %p127, %p128
    %p130 = scmp.ne.s32.totalorder %s122, %s125
    %p131 = scmp.eq.s32.totalorder %s9, 0
    %p132 = por %p130, %p131
    %p133 = scmp.ne.s32.totalorder %s122, %s125
    %p134 = scmp.eq.s32.totalorder %s14, 1
    %p135 = por %p133, %p134
    %p136 = scmp.ne.s32.totalorder %s125, %s126
    %p137 = scmp.eq.s32.totalorder %s14, 0
    %p138 = por %p136, %p137
    %p139 = scmp.ne.s32.totalorder %s125, %s126
    %p140 = scmp.eq.s32.totalorder %s15, 1
    %p141 = por %p139, %p140
    %p143 = scmp.ne.s32.totalorder %s126, %s142
    %p144 = scmp.eq.s32.totalorder %s15, 0
    %p145 = por %p143, %p144
    %p146 = scmp.le.s32.totalorder 1, %s9
    %p147 = scmp.lt.s32.totalorder %s9, 3
    %p148 = pnand %p146, %p147
    %p149 = pneg %p148
    // Predicated region
    $region9: #{linear_pallas_forward.1} parent=5 // pred_check
      _
    $region10: #{linear_pallas_forward.1} parent=5 // pred_check_branch
      %151 = sbr.rel (%p148) target = $region12
    $region11: #{linear_pallas_forward.1} parent=5 // pred_region
      %s152 = ssub.s32 %s9, 1
      // Predicated region
      $region13: #{linear_pallas_forward.1} parent=11 // pred_check
        %p153 = pneg %p84
      $region14: #{linear_pallas_forward.1} parent=11 // pred_check_branch
        %155 = sbr.rel (%p153) target = $region16
      $region15: #{linear_pallas_forward.1} parent=11 // pred_region
        %s156 = smul.u32 64, %s20
        %s157 = smul.u32 3, %s21
        %p158 = scmp.lt.s32.totalorder %s156, 63
        %s159 = scalar_select %p158, %s156, 63
        %p160 = scmp.lt.s32.totalorder %s157, 2
        %s161 = scalar_select %p160, %s157, 2
        %s162 = smul.addr %s159, 3
        %s163 = sadd.s32 %s161, %s162
        %s164 = smul.addr %s163, 4
        %s165 = scalar_lea.vmem %s1, %s164
        %s166 = smul.u32 64, %s20
        %s167 = smul.u32 3, %s21
      $region16: #{linear_pallas_forward.1} parent=11 // pred_fallthru
        _
      // Predicated region
      $region17: #{linear_pallas_forward.1} parent=11 // pred_check
        %p168 = pneg %p110
      $region18: #{linear_pallas_forward.1} parent=11 // pred_check_branch
        %170 = sbr.rel (%p168) target = $region20
      $region19: #{linear_pallas_forward.1} parent=11 // pred_region
        %s171 = smul.u32 4, %s20
        %p172 = scmp.lt.s32.totalorder %s171, 3
        %s173 = scalar_select %p172, %s171, 3
        %s174 = scalar_lea.vmem %s2, %s173
        %s175 = smul.u32 4, %s20
      $region20: #{linear_pallas_forward.1} parent=11 // pred_fallthru
        _
    $region12: #{linear_pallas_forward.1} parent=5 // pred_fallthru
      _
    %p176 = scmp.lt.s32.totalorder %s9, 2
    // Predicated region
    $region21: #{linear_pallas_forward.1} parent=5 // pred_check
      %p177 = pneg %p176
    $region22: #{linear_pallas_forward.1} parent=5 // pred_check_branch
      %179 = sbr.rel (%p177) target = $region24
    $region23: #{linear_pallas_forward.1} parent=5 // pred_region
      // Predicated region
      $region25: #{linear_pallas_forward.1} parent=23 // pred_check
        %p180 = pneg %p50
      $region26: #{linear_pallas_forward.1} parent=23 // pred_check_branch
        %182 = sbr.rel (%p180) target = $region28
      $region27: #{linear_pallas_forward.1} parent=23 // pred_region
        %s183 = smul.u32 32, %s16
        %s184 = smul.u32 3, %s18
        %p185 = scmp.lt.s32.totalorder %s183, 63
        %s186 = scalar_select %p185, %s183, 63
        %p187 = scmp.lt.s32.totalorder %s184, 2
        %s188 = scalar_select %p187, %s184, 2
        %s189 = smul.addr %s186, 3
        %s190 = sadd.s32 %s188, %s189
        %s191 = smul.addr %s190, 4
        %s192 = scalar_lea.vmem %s0, %s191
        %s193 = smul.u32 32, %s16
        %s194 = smul.u32 3, %s18
      $region28: #{linear_pallas_forward.1} parent=23 // pred_fallthru
        _
    $region24: #{linear_pallas_forward.1} parent=5 // pred_fallthru
      _
    %p195 = scmp.le.s32.totalorder 1, %s9
    %p196 = scmp.lt.s32.totalorder %s9, 3
    %p197 = pnand %p195, %p196
    %p198 = pneg %p197
    // Predicated region
    $region29: #{linear_pallas_forward.1} parent=5 // pred_check
      _
    $region30: #{linear_pallas_forward.1} parent=5 // pred_check_branch
      %200 = sbr.rel (%p197) target = $region32
    $region31: #{linear_pallas_forward.1} parent=5 // pred_region
      %s201 = ssub.s32 %s9, 1
      %s202 = smul.u32 32, %s19
      %s203 = smul.u32 3, %s21
      %p204 = scmp.lt.s32.totalorder %s202, 63
      %s205 = scalar_select %p204, %s202, 63
      %p206 = scmp.lt.s32.totalorder %s203, 2
      %s207 = scalar_select %p206, %s203, 2
      %s208 = smul.addr %s205, 3
      %s209 = sadd.s32 %s207, %s208
      %s210 = smul.addr %s209, 4
      %s211 = scalar_lea.vmem %s0, %s210
      %p212 = pneg %p56
      %p213 = pneg %p53
      %s214 = smul.u32 64, %s20
      %s215 = smul.u32 3, %s21
      %p216 = scmp.lt.s32.totalorder %s214, 63
      %s217 = scalar_select %p216, %s214, 63
      %p218 = scmp.lt.s32.totalorder %s215, 2
      %s219 = scalar_select %p218, %s215, 2
      %s220 = smul.addr %s217, 3
      %s221 = sadd.s32 %s219, %s220
      %s222 = smul.addr %s221, 4
      %s223 = scalar_lea.vmem %s1, %s222
      %p224 = pneg %p84
      %p225 = pneg %p81
      %s226 = smul.u32 4, %s20
      %p227 = scmp.lt.s32.totalorder %s226, 3
      %s228 = scalar_select %p227, %s226, 3
      %s229 = scalar_lea.vmem %s2, %s228
      %p230 = pneg %p110
      %p231 = pneg %p107
      %p232 = pneg %p138
      %p233 = pneg %p135
      %s234 = smul.u32 32, %s19
      %s235 = smul.u32 4, %s20
      %p236 = scmp.lt.s32.totalorder %s234, 63
      %s237 = scalar_select %p236, %s234, 63
      %p238 = scmp.lt.s32.totalorder %s235, 3
      %s239 = scalar_select %p238, %s235, 3
      %s240 = smul.addr %s237, 4
      %s241 = sadd.s32 %s239, %s240
      %s242 = smul.addr %s241, 8
      %s243 = scalar_lea.vmem %s3, %s242
      %s244 = smul.u32 32, %s19
      %s245 = smul.u32 3, %s21
      %p246 = scmp.lt.s32.totalorder %s244, 63
      %s247 = scalar_select %p246, %s244, 63
      %p248 = scmp.lt.s32.totalorder %s245, 2
      %s249 = scalar_select %p248, %s245, 2
      %s250 = smul.addr %s247, 3
      %s251 = sadd.s32 %s249, %s250
      %s252 = smul.addr %s251, 4
      %s253 = scalar_lea.vmem %s0, %s252
      %s254 = smul.u32 32, %s19
      %s255 = smul.u32 3, %s21
      %s256 = smul.u32 64, %s20
      %s257 = smul.u32 3, %s21
      %p258 = scmp.lt.s32.totalorder %s256, 63
      %s259 = scalar_select %p258, %s256, 63
      %p260 = scmp.lt.s32.totalorder %s257, 2
      %s261 = scalar_select %p260, %s257, 2
      %s262 = smul.addr %s259, 3
      %s263 = sadd.s32 %s261, %s262
      %s264 = smul.addr %s263, 4
      %s265 = scalar_lea.vmem %s1, %s264
      %s266 = smul.u32 64, %s20
      %s267 = smul.u32 3, %s21
      %s268 = smul.u32 4, %s20
      %p269 = scmp.lt.s32.totalorder %s268, 3
      %s270 = scalar_select %p269, %s268, 3
      %s271 = scalar_lea.vmem %s2, %s270
      %s272 = smul.u32 4, %s20
      %s273 = smul.u32 32, %s19
      %s274 = smul.u32 4, %s20
      %p275 = scmp.lt.s32.totalorder %s273, 63
      %s276 = scalar_select %p275, %s273, 63
      %p277 = scmp.lt.s32.totalorder %s274, 3
      %s278 = scalar_select %p277, %s274, 3
      %s279 = smul.addr %s276, 4
      %s280 = sadd.s32 %s278, %s279
      %s281 = smul.addr %s280, 8
      %s282 = scalar_lea.vmem %s3, %s281
      %s283 = smul.u32 32, %s19
      %s284 = smul.u32 4, %s20
      %v285 = vld [vmem:[%s253] sm:$0xff]
      %v286 = vld [vmem:[%s253 + $0x8] sm:$0xf]
      %v287 = vld [vmem:[%s253 + $0xc] sm:$0xff]
      %v288 = vld [vmem:[%s253 + $0x14] sm:$0xf]
      %v289 = vld [vmem:[%s253 + $0x18] sm:$0xff]
      %v290 = vld [vmem:[%s253 + $0x20] sm:$0xf]
      %v291 = vld [vmem:[%s253 + $0x24] sm:$0xff]
      %v292 = vld [vmem:[%s253 + $0x2c] sm:$0xf]
      %v293 = vld [vmem:[%s253 + $0x30] sm:$0xff]
      %v294 = vld [vmem:[%s253 + $0x38] sm:$0xf]
      %v295 = vld [vmem:[%s253 + $0x3c] sm:$0xff]
      %v296 = vld [vmem:[%s253 + $0x44] sm:$0xf]
      %v297 = vld [vmem:[%s253 + $0x48] sm:$0xff]
      %v298 = vld [vmem:[%s253 + $0x50] sm:$0xf]
      %v299 = vld [vmem:[%s253 + $0x54] sm:$0xff]
      %v300 = vld [vmem:[%s253 + $0x5c] sm:$0xf]
      %v301 = vld [vmem:[%s253 + $0x60] sm:$0xff]
      %v302 = vld [vmem:[%s253 + $0x68] sm:$0xf]
      %v303 = vld [vmem:[%s253 + $0x6c] sm:$0xff]
      %v304 = vld [vmem:[%s253 + $0x74] sm:$0xf]
      %v305 = vld [vmem:[%s253 + $0x78] sm:$0xff]
      %v306 = vld [vmem:[%s253 + $0x80] sm:$0xf]
      %v307 = vld [vmem:[%s253 + $0x84] sm:$0xff]
      %v308 = vld [vmem:[%s253 + $0x8c] sm:$0xf]
      %v309 = vld [vmem:[%s253 + $0x90] sm:$0xff]
      %v310 = vld [vmem:[%s253 + $0x98] sm:$0xf]
      %v311 = vld [vmem:[%s253 + $0x9c] sm:$0xff]
      %v312 = vld [vmem:[%s253 + $0xa4] sm:$0xf]
      %v313 = vld [vmem:[%s253 + $0xa8] sm:$0xff]
      %v314 = vld [vmem:[%s253 + $0xb0] sm:$0xf]
      %v315 = vld [vmem:[%s253 + $0xb4] sm:$0xff]
      %v316 = vld [vmem:[%s253 + $0xbc] sm:$0xf]
      %v317 = vld [vmem:[%s253 + $0xc0] sm:$0xff]
      %v318 = vld [vmem:[%s253 + $0xc8] sm:$0xf]
      %v319 = vld [vmem:[%s253 + $0xcc] sm:$0xff]
      %v320 = vld [vmem:[%s253 + $0xd4] sm:$0xf]
      %v321 = vld [vmem:[%s253 + $0xd8] sm:$0xff]
      %v322 = vld [vmem:[%s253 + $0xe0] sm:$0xf]
      %v323 = vld [vmem:[%s253 + $0xe4] sm:$0xff]
      %v324 = vld [vmem:[%s253 + $0xec] sm:$0xf]
      %v325 = vld [vmem:[%s253 + $0xf0] sm:$0xff]
      %v326 = vld [vmem:[%s253 + $0xf8] sm:$0xf]
      %v327 = vld [vmem:[%s253 + $0xfc] sm:$0xff]
      %v328 = vld [vmem:[%s253 + $0x104] sm:$0xf]
      %v329 = vld [vmem:[%s253 + $0x108] sm:$0xff]
      %v330 = vld [vmem:[%s253 + $0x110] sm:$0xf]
      %v331 = vld [vmem:[%s253 + $0x114] sm:$0xff]
      %v332 = vld [vmem:[%s253 + $0x11c] sm:$0xf]
      %v333 = vld [vmem:[%s253 + $0x120] sm:$0xff]
      %v334 = vld [vmem:[%s253 + $0x128] sm:$0xf]
      %v335 = vld [vmem:[%s253 + $0x12c] sm:$0xff]
      %v336 = vld [vmem:[%s253 + $0x134] sm:$0xf]
      %v337 = vld [vmem:[%s253 + $0x138] sm:$0xff]
      %v338 = vld [vmem:[%s253 + $0x140] sm:$0xf]
      %v339 = vld [vmem:[%s253 + $0x144] sm:$0xff]
      %v340 = vld [vmem:[%s253 + $0x14c] sm:$0xf]
      %v341 = vld [vmem:[%s253 + $0x150] sm:$0xff]
      %v342 = vld [vmem:[%s253 + $0x158] sm:$0xf]
      %v343 = vld [vmem:[%s253 + $0x15c] sm:$0xff]
      %v344 = vld [vmem:[%s253 + $0x164] sm:$0xf]
      %v345 = vld [vmem:[%s253 + $0x168] sm:$0xff]
      %v346 = vld [vmem:[%s253 + $0x170] sm:$0xf]
      %v347 = vld [vmem:[%s253 + $0x174] sm:$0xff]
      %v348 = vld [vmem:[%s253 + $0x17c] sm:$0xf]
      %v349 = vld [vmem:[%s265] sm:$0xff]
      %v350 = vld [vmem:[%s265 + $0x8] sm:$0xf]
      %v351 = vld [vmem:[%s265 + $0xc] sm:$0xff]
      %v352 = vld [vmem:[%s265 + $0x14] sm:$0xf]
      %v353 = vld [vmem:[%s265 + $0x18] sm:$0xff]
      %v354 = vld [vmem:[%s265 + $0x20] sm:$0xf]
      %v355 = vld [vmem:[%s265 + $0x24] sm:$0xff]
      %v356 = vld [vmem:[%s265 + $0x2c] sm:$0xf]
      %v357 = vld [vmem:[%s265 + $0x30] sm:$0xff]
      %v358 = vld [vmem:[%s265 + $0x38] sm:$0xf]
      %v359 = vld [vmem:[%s265 + $0x3c] sm:$0xff]
      %v360 = vld [vmem:[%s265 + $0x44] sm:$0xf]
      %v361 = vld [vmem:[%s265 + $0x48] sm:$0xff]
      %v362 = vld [vmem:[%s265 + $0x50] sm:$0xf]
      %v363 = vld [vmem:[%s265 + $0x54] sm:$0xff]
      %v364 = vld [vmem:[%s265 + $0x5c] sm:$0xf]
      %v365 = vld [vmem:[%s265 + $0x60] sm:$0xff]
      %v366 = vld [vmem:[%s265 + $0x68] sm:$0xf]
      %v367 = vld [vmem:[%s265 + $0x6c] sm:$0xff]
      %v368 = vld [vmem:[%s265 + $0x74] sm:$0xf]
      %v369 = vld [vmem:[%s265 + $0x78] sm:$0xff]
      %v370 = vld [vmem:[%s265 + $0x80] sm:$0xf]
      %v371 = vld [vmem:[%s265 + $0x84] sm:$0xff]
      %v372 = vld [vmem:[%s265 + $0x8c] sm:$0xf]
      %v373 = vld [vmem:[%s265 + $0x90] sm:$0xff]
      %v374 = vld [vmem:[%s265 + $0x98] sm:$0xf]
      %v375 = vld [vmem:[%s265 + $0x9c] sm:$0xff]
      %v376 = vld [vmem:[%s265 + $0xa4] sm:$0xf]
      %v377 = vld [vmem:[%s265 + $0xa8] sm:$0xff]
      %v378 = vld [vmem:[%s265 + $0xb0] sm:$0xf]
      %v379 = vld [vmem:[%s265 + $0xb4] sm:$0xff]
      %v380 = vld [vmem:[%s265 + $0xbc] sm:$0xf]
      %v381 = vld [vmem:[%s265 + $0xc0] sm:$0xff]
      %v382 = vld [vmem:[%s265 + $0xc8] sm:$0xf]
      %v383 = vld [vmem:[%s265 + $0xcc] sm:$0xff]
      %v384 = vld [vmem:[%s265 + $0xd4] sm:$0xf]
      %v385 = vld [vmem:[%s265 + $0xd8] sm:$0xff]
      %v386 = vld [vmem:[%s265 + $0xe0] sm:$0xf]
      %v387 = vld [vmem:[%s265 + $0xe4] sm:$0xff]
      %v388 = vld [vmem:[%s265 + $0xec] sm:$0xf]
      %v389 = vld [vmem:[%s265 + $0xf0] sm:$0xff]
      %v390 = vld [vmem:[%s265 + $0xf8] sm:$0xf]
      %v391 = vld [vmem:[%s265 + $0xfc] sm:$0xff]
      %v392 = vld [vmem:[%s265 + $0x104] sm:$0xf]
      %v393 = vld [vmem:[%s265 + $0x108] sm:$0xff]
      %v394 = vld [vmem:[%s265 + $0x110] sm:$0xf]
      %v395 = vld [vmem:[%s265 + $0x114] sm:$0xff]
      %v396 = vld [vmem:[%s265 + $0x11c] sm:$0xf]
      %v397 = vld [vmem:[%s265 + $0x120] sm:$0xff]
      %v398 = vld [vmem:[%s265 + $0x128] sm:$0xf]
      %v399 = vld [vmem:[%s265 + $0x12c] sm:$0xff]
      %v400 = vld [vmem:[%s265 + $0x134] sm:$0xf]
      %v401 = vld [vmem:[%s265 + $0x138] sm:$0xff]
      %v402 = vld [vmem:[%s265 + $0x140] sm:$0xf]
      %v403 = vld [vmem:[%s265 + $0x144] sm:$0xff]
      %v404 = vld [vmem:[%s265 + $0x14c] sm:$0xf]
      %v405 = vld [vmem:[%s265 + $0x150] sm:$0xff]
      %v406 = vld [vmem:[%s265 + $0x158] sm:$0xf]
      %v407 = vld [vmem:[%s265 + $0x15c] sm:$0xff]
      %v408 = vld [vmem:[%s265 + $0x164] sm:$0xf]
      %v409 = vld [vmem:[%s265 + $0x168] sm:$0xff]
      %v410 = vld [vmem:[%s265 + $0x170] sm:$0xf]
      %v411 = vld [vmem:[%s265 + $0x174] sm:$0xff]
      %v412 = vld [vmem:[%s265 + $0x17c] sm:$0xf]
      %v413 = vld [vmem:[%s265 + $0x180] sm:$0xff]
      %v414 = vld [vmem:[%s265 + $0x188] sm:$0xf]
      %v415 = vld [vmem:[%s265 + $0x18c] sm:$0xff]
      %v416 = vld [vmem:[%s265 + $0x194] sm:$0xf]
      %v417 = vld [vmem:[%s265 + $0x198] sm:$0xff]
      %v418 = vld [vmem:[%s265 + $0x1a0] sm:$0xf]
      %v419 = vld [vmem:[%s265 + $0x1a4] sm:$0xff]
      %v420 = vld [vmem:[%s265 + $0x1ac] sm:$0xf]
      %v421 = vld [vmem:[%s265 + $0x1b0] sm:$0xff]
      %v422 = vld [vmem:[%s265 + $0x1b8] sm:$0xf]
      %v423 = vld [vmem:[%s265 + $0x1bc] sm:$0xff]
      %v424 = vld [vmem:[%s265 + $0x1c4] sm:$0xf]
      %v425 = vld [vmem:[%s265 + $0x1c8] sm:$0xff]
      %v426 = vld [vmem:[%s265 + $0x1d0] sm:$0xf]
      %v427 = vld [vmem:[%s265 + $0x1d4] sm:$0xff]
      %v428 = vld [vmem:[%s265 + $0x1dc] sm:$0xf]
      %v429 = vld [vmem:[%s265 + $0x1e0] sm:$0xff]
      %v430 = vld [vmem:[%s265 + $0x1e8] sm:$0xf]
      %v431 = vld [vmem:[%s265 + $0x1ec] sm:$0xff]
      %v432 = vld [vmem:[%s265 + $0x1f4] sm:$0xf]
      %v433 = vld [vmem:[%s265 + $0x1f8] sm:$0xff]
      %v434 = vld [vmem:[%s265 + $0x200] sm:$0xf]
      %v435 = vld [vmem:[%s265 + $0x204] sm:$0xff]
      %v436 = vld [vmem:[%s265 + $0x20c] sm:$0xf]
      %v437 = vld [vmem:[%s265 + $0x210] sm:$0xff]
      %v438 = vld [vmem:[%s265 + $0x218] sm:$0xf]
      %v439 = vld [vmem:[%s265 + $0x21c] sm:$0xff]
      %v440 = vld [vmem:[%s265 + $0x224] sm:$0xf]
      %v441 = vld [vmem:[%s265 + $0x228] sm:$0xff]
      %v442 = vld [vmem:[%s265 + $0x230] sm:$0xf]
      %v443 = vld [vmem:[%s265 + $0x234] sm:$0xff]
      %v444 = vld [vmem:[%s265 + $0x23c] sm:$0xf]
      %v445 = vld [vmem:[%s265 + $0x240] sm:$0xff]
      %v446 = vld [vmem:[%s265 + $0x248] sm:$0xf]
      %v447 = vld [vmem:[%s265 + $0x24c] sm:$0xff]
      %v448 = vld [vmem:[%s265 + $0x254] sm:$0xf]
      %v449 = vld [vmem:[%s265 + $0x258] sm:$0xff]
      %v450 = vld [vmem:[%s265 + $0x260] sm:$0xf]
      %v451 = vld [vmem:[%s265 + $0x264] sm:$0xff]
      %v452 = vld [vmem:[%s265 + $0x26c] sm:$0xf]
      %v453 = vld [vmem:[%s265 + $0x270] sm:$0xff]
      %v454 = vld [vmem:[%s265 + $0x278] sm:$0xf]
      %v455 = vld [vmem:[%s265 + $0x27c] sm:$0xff]
      %v456 = vld [vmem:[%s265 + $0x284] sm:$0xf]
      %v457 = vld [vmem:[%s265 + $0x288] sm:$0xff]
      %v458 = vld [vmem:[%s265 + $0x290] sm:$0xf]
      %v459 = vld [vmem:[%s265 + $0x294] sm:$0xff]
      %v460 = vld [vmem:[%s265 + $0x29c] sm:$0xf]
      %v461 = vld [vmem:[%s265 + $0x2a0] sm:$0xff]
      %v462 = vld [vmem:[%s265 + $0x2a8] sm:$0xf]
      %v463 = vld [vmem:[%s265 + $0x2ac] sm:$0xff]
      %v464 = vld [vmem:[%s265 + $0x2b4] sm:$0xf]
      %v465 = vld [vmem:[%s265 + $0x2b8] sm:$0xff]
      %v466 = vld [vmem:[%s265 + $0x2c0] sm:$0xf]
      %v467 = vld [vmem:[%s265 + $0x2c4] sm:$0xff]
      %v468 = vld [vmem:[%s265 + $0x2cc] sm:$0xf]
      %v469 = vld [vmem:[%s265 + $0x2d0] sm:$0xff]
      %v470 = vld [vmem:[%s265 + $0x2d8] sm:$0xf]
      %v471 = vld [vmem:[%s265 + $0x2dc] sm:$0xff]
      %v472 = vld [vmem:[%s265 + $0x2e4] sm:$0xf]
      %v473 = vld [vmem:[%s265 + $0x2e8] sm:$0xff]
      %v474 = vld [vmem:[%s265 + $0x2f0] sm:$0xf]
      %v475 = vld [vmem:[%s265 + $0x2f4] sm:$0xff]
      %v476 = vld [vmem:[%s265 + $0x2fc] sm:$0xf]
      %v477 = vld [vmem:[%s271] sm:$0xf]
      %v479 = vperm.slane %v477, 0
      %v480 = vperm.slane %v477, 1
      %v481 = vperm.slane %v477, 2
      %v482 = vperm.slane %v477, 3
      %v551 = vunpack.c.l.b16 %v285
      %v552 = vunpack.c.h.b16 %v285
      %v553 = vunpack.c.l.b16 %v286
      %v554 = vunpack.c.l.b16 %v287
      %v555 = vunpack.c.h.b16 %v287
      %v556 = vunpack.c.l.b16 %v288
      %v557 = vunpack.c.l.b16 %v289
      %v558 = vunpack.c.h.b16 %v289
      %v559 = vunpack.c.l.b16 %v290
      %v560 = vunpack.c.l.b16 %v291
      %v561 = vunpack.c.h.b16 %v291
      %v562 = vunpack.c.l.b16 %v292
      %v563 = vunpack.c.l.b16 %v293
      %v564 = vunpack.c.h.b16 %v293
      %v565 = vunpack.c.l.b16 %v294
      %v566 = vunpack.c.l.b16 %v295
      %v567 = vunpack.c.h.b16 %v295
      %v568 = vunpack.c.l.b16 %v296
      %v569 = vunpack.c.l.b16 %v297
      %v570 = vunpack.c.h.b16 %v297
      %v571 = vunpack.c.l.b16 %v298
      %v572 = vunpack.c.l.b16 %v299
      %v573 = vunpack.c.h.b16 %v299
      %v574 = vunpack.c.l.b16 %v300
      %v575 = vunpack.c.l.b16 %v301
      %v576 = vunpack.c.h.b16 %v301
      %v577 = vunpack.c.l.b16 %v302
      %v578 = vunpack.c.l.b16 %v303
      %v579 = vunpack.c.h.b16 %v303
      %v580 = vunpack.c.l.b16 %v304
      %v581 = vunpack.c.l.b16 %v305
      %v582 = vunpack.c.h.b16 %v305
      %v583 = vunpack.c.l.b16 %v306
      %v584 = vunpack.c.l.b16 %v307
      %v585 = vunpack.c.h.b16 %v307
      %v586 = vunpack.c.l.b16 %v308
      %v587 = vunpack.c.l.b16 %v309
      %v588 = vunpack.c.h.b16 %v309
      %v589 = vunpack.c.l.b16 %v310
      %v590 = vunpack.c.l.b16 %v311
      %v591 = vunpack.c.h.b16 %v311
      %v592 = vunpack.c.l.b16 %v312
      %v593 = vunpack.c.l.b16 %v313
      %v594 = vunpack.c.h.b16 %v313
      %v595 = vunpack.c.l.b16 %v314
      %v596 = vunpack.c.l.b16 %v315
      %v597 = vunpack.c.h.b16 %v315
      %v598 = vunpack.c.l.b16 %v316
      %v599 = vunpack.c.l.b16 %v317
      %v600 = vunpack.c.h.b16 %v317
      %v601 = vunpack.c.l.b16 %v318
      %v602 = vunpack.c.l.b16 %v319
      %v603 = vunpack.c.h.b16 %v319
      %v604 = vunpack.c.l.b16 %v320
      %v605 = vunpack.c.l.b16 %v321
      %v606 = vunpack.c.h.b16 %v321
      %v607 = vunpack.c.l.b16 %v322
      %v608 = vunpack.c.l.b16 %v323
      %v609 = vunpack.c.h.b16 %v323
      %v610 = vunpack.c.l.b16 %v324
      %v611 = vunpack.c.l.b16 %v325
      %v612 = vunpack.c.h.b16 %v325
      %v613 = vunpack.c.l.b16 %v326
      %v614 = vunpack.c.l.b16 %v327
      %v615 = vunpack.c.h.b16 %v327
      %v616 = vunpack.c.l.b16 %v328
      %v617 = vunpack.c.l.b16 %v329
      %v618 = vunpack.c.h.b16 %v329
      %v619 = vunpack.c.l.b16 %v330
      %v620 = vunpack.c.l.b16 %v331
      %v621 = vunpack.c.h.b16 %v331
      %v622 = vunpack.c.l.b16 %v332
      %v623 = vunpack.c.l.b16 %v333
      %v624 = vunpack.c.h.b16 %v333
      %v625 = vunpack.c.l.b16 %v334
      %v626 = vunpack.c.l.b16 %v335
      %v627 = vunpack.c.h.b16 %v335
      %v628 = vunpack.c.l.b16 %v336
      %v629 = vunpack.c.l.b16 %v337
      %v630 = vunpack.c.h.b16 %v337
      %v631 = vunpack.c.l.b16 %v338
      %v632 = vunpack.c.l.b16 %v339
      %v633 = vunpack.c.h.b16 %v339
      %v634 = vunpack.c.l.b16 %v340
      %v635 = vunpack.c.l.b16 %v341
      %v636 = vunpack.c.h.b16 %v341
      %v637 = vunpack.c.l.b16 %v342
      %v638 = vunpack.c.l.b16 %v343
      %v639 = vunpack.c.h.b16 %v343
      %v640 = vunpack.c.l.b16 %v344
      %v641 = vunpack.c.l.b16 %v345
      %v642 = vunpack.c.h.b16 %v345
      %v643 = vunpack.c.l.b16 %v346
      %v644 = vunpack.c.l.b16 %v347
      %v645 = vunpack.c.h.b16 %v347
      %v646 = vunpack.c.l.b16 %v348
      %v647 = vpack.c.b16 %v554, %v551
      %v648 = vpack.c.b16 %v555, %v552
      %v649 = vpack.c.b16 %v556, %v553
      %v650 = vpack.c.b16 %v560, %v557
      %v651 = vpack.c.b16 %v561, %v558
      %v652 = vpack.c.b16 %v562, %v559
      %v653 = vpack.c.b16 %v566, %v563
      %v654 = vpack.c.b16 %v567, %v564
      %v655 = vpack.c.b16 %v568, %v565
      %v656 = vpack.c.b16 %v572, %v569
      %v657 = vpack.c.b16 %v573, %v570
      %v658 = vpack.c.b16 %v574, %v571
      %v659 = vpack.c.b16 %v578, %v575
      %v660 = vpack.c.b16 %v579, %v576
      %v661 = vpack.c.b16 %v580, %v577
      %v662 = vpack.c.b16 %v584, %v581
      %v663 = vpack.c.b16 %v585, %v582
      %v664 = vpack.c.b16 %v586, %v583
      %v665 = vpack.c.b16 %v590, %v587
      %v666 = vpack.c.b16 %v591, %v588
      %v667 = vpack.c.b16 %v592, %v589
      %v668 = vpack.c.b16 %v596, %v593
      %v669 = vpack.c.b16 %v597, %v594
      %v670 = vpack.c.b16 %v598, %v595
      %v671 = vpack.c.b16 %v602, %v599
      %v672 = vpack.c.b16 %v603, %v600
      %v673 = vpack.c.b16 %v604, %v601
      %v674 = vpack.c.b16 %v608, %v605
      %v675 = vpack.c.b16 %v609, %v606
      %v676 = vpack.c.b16 %v610, %v607
      %v677 = vpack.c.b16 %v614, %v611
      %v678 = vpack.c.b16 %v615, %v612
      %v679 = vpack.c.b16 %v616, %v613
      %v680 = vpack.c.b16 %v620, %v617
      %v681 = vpack.c.b16 %v621, %v618
      %v682 = vpack.c.b16 %v622, %v619
      %v683 = vpack.c.b16 %v626, %v623
      %v684 = vpack.c.b16 %v627, %v624
      %v685 = vpack.c.b16 %v628, %v625
      %v686 = vpack.c.b16 %v632, %v629
      %v687 = vpack.c.b16 %v633, %v630
      %v688 = vpack.c.b16 %v634, %v631
      %v689 = vpack.c.b16 %v638, %v635
      %v690 = vpack.c.b16 %v639, %v636
      %v691 = vpack.c.b16 %v640, %v637
      %v692 = vpack.c.b16 %v644, %v641
      %v693 = vpack.c.b16 %v645, %v642
      %v694 = vpack.c.b16 %v646, %v643
      %v871 = vunpack.c.l.b16 %v349
      %v872 = vunpack.c.h.b16 %v349
      %v873 = vunpack.c.l.b16 %v350
      %v874 = vunpack.c.l.b16 %v351
      %v875 = vunpack.c.h.b16 %v351
      %v876 = vunpack.c.l.b16 %v352
      %v877 = vunpack.c.l.b16 %v353
      %v878 = vunpack.c.h.b16 %v353
      %v879 = vunpack.c.l.b16 %v354
      %v880 = vunpack.c.l.b16 %v355
      %v881 = vunpack.c.h.b16 %v355
      %v882 = vunpack.c.l.b16 %v356
      %v883 = vunpack.c.l.b16 %v357
      %v884 = vunpack.c.h.b16 %v357
      %v885 = vunpack.c.l.b16 %v358
      %v886 = vunpack.c.l.b16 %v359
      %v887 = vunpack.c.h.b16 %v359
      %v888 = vunpack.c.l.b16 %v360
      %v889 = vunpack.c.l.b16 %v361
      %v890 = vunpack.c.h.b16 %v361
      %v891 = vunpack.c.l.b16 %v362
      %v892 = vunpack.c.l.b16 %v363
      %v893 = vunpack.c.h.b16 %v363
      %v894 = vunpack.c.l.b16 %v364
      %v895 = vunpack.c.l.b16 %v365
      %v896 = vunpack.c.h.b16 %v365
      %v897 = vunpack.c.l.b16 %v366
      %v898 = vunpack.c.l.b16 %v367
      %v899 = vunpack.c.h.b16 %v367
      %v900 = vunpack.c.l.b16 %v368
      %v901 = vunpack.c.l.b16 %v369
      %v902 = vunpack.c.h.b16 %v369
      %v903 = vunpack.c.l.b16 %v370
      %v904 = vunpack.c.l.b16 %v371
      %v905 = vunpack.c.h.b16 %v371
      %v906 = vunpack.c.l.b16 %v372
      %v907 = vunpack.c.l.b16 %v373
      %v908 = vunpack.c.h.b16 %v373
      %v909 = vunpack.c.l.b16 %v374
      %v910 = vunpack.c.l.b16 %v375
      %v911 = vunpack.c.h.b16 %v375
      %v912 = vunpack.c.l.b16 %v376
      %v913 = vunpack.c.l.b16 %v377
      %v914 = vunpack.c.h.b16 %v377
      %v915 = vunpack.c.l.b16 %v378
      %v916 = vunpack.c.l.b16 %v379
      %v917 = vunpack.c.h.b16 %v379
      %v918 = vunpack.c.l.b16 %v380
      %v919 = vunpack.c.l.b16 %v381
      %v920 = vunpack.c.h.b16 %v381
      %v921 = vunpack.c.l.b16 %v382
      %v922 = vunpack.c.l.b16 %v383
      %v923 = vunpack.c.h.b16 %v383
      %v924 = vunpack.c.l.b16 %v384
      %v925 = vunpack.c.l.b16 %v385
      %v926 = vunpack.c.h.b16 %v385
      %v927 = vunpack.c.l.b16 %v386
      %v928 = vunpack.c.l.b16 %v387
      %v929 = vunpack.c.h.b16 %v387
      %v930 = vunpack.c.l.b16 %v388
      %v931 = vunpack.c.l.b16 %v389
      %v932 = vunpack.c.h.b16 %v389
      %v933 = vunpack.c.l.b16 %v390
      %v934 = vunpack.c.l.b16 %v391
      %v935 = vunpack.c.h.b16 %v391
      %v936 = vunpack.c.l.b16 %v392
      %v937 = vunpack.c.l.b16 %v393
      %v938 = vunpack.c.h.b16 %v393
      %v939 = vunpack.c.l.b16 %v394
      %v940 = vunpack.c.l.b16 %v395
      %v941 = vunpack.c.h.b16 %v395
      %v942 = vunpack.c.l.b16 %v396
      %v943 = vunpack.c.l.b16 %v397
      %v944 = vunpack.c.h.b16 %v397
      %v945 = vunpack.c.l.b16 %v398
      %v946 = vunpack.c.l.b16 %v399
      %v947 = vunpack.c.h.b16 %v399
      %v948 = vunpack.c.l.b16 %v400
      %v949 = vunpack.c.l.b16 %v401
      %v950 = vunpack.c.h.b16 %v401
      %v951 = vunpack.c.l.b16 %v402
      %v952 = vunpack.c.l.b16 %v403
      %v953 = vunpack.c.h.b16 %v403
      %v954 = vunpack.c.l.b16 %v404
      %v955 = vunpack.c.l.b16 %v405
      %v956 = vunpack.c.h.b16 %v405
      %v957 = vunpack.c.l.b16 %v406
      %v958 = vunpack.c.l.b16 %v407
      %v959 = vunpack.c.h.b16 %v407
      %v960 = vunpack.c.l.b16 %v408
      %v961 = vunpack.c.l.b16 %v409
      %v962 = vunpack.c.h.b16 %v409
      %v963 = vunpack.c.l.b16 %v410
      %v964 = vunpack.c.l.b16 %v411
      %v965 = vunpack.c.h.b16 %v411
      %v966 = vunpack.c.l.b16 %v412
      %v967 = vunpack.c.l.b16 %v413
      %v968 = vunpack.c.h.b16 %v413
      %v969 = vunpack.c.l.b16 %v414
      %v970 = vunpack.c.l.b16 %v415
      %v971 = vunpack.c.h.b16 %v415
      %v972 = vunpack.c.l.b16 %v416
      %v973 = vunpack.c.l.b16 %v417
      %v974 = vunpack.c.h.b16 %v417
      %v975 = vunpack.c.l.b16 %v418
      %v976 = vunpack.c.l.b16 %v419
      %v977 = vunpack.c.h.b16 %v419
      %v978 = vunpack.c.l.b16 %v420
      %v979 = vunpack.c.l.b16 %v421
      %v980 = vunpack.c.h.b16 %v421
      %v981 = vunpack.c.l.b16 %v422
      %v982 = vunpack.c.l.b16 %v423
      %v983 = vunpack.c.h.b16 %v423
      %v984 = vunpack.c.l.b16 %v424
      %v985 = vunpack.c.l.b16 %v425
      %v986 = vunpack.c.h.b16 %v425
      %v987 = vunpack.c.l.b16 %v426
      %v988 = vunpack.c.l.b16 %v427
      %v989 = vunpack.c.h.b16 %v427
      %v990 = vunpack.c.l.b16 %v428
      %v991 = vunpack.c.l.b16 %v429
      %v992 = vunpack.c.h.b16 %v429
      %v993 = vunpack.c.l.b16 %v430
      %v994 = vunpack.c.l.b16 %v431
      %v995 = vunpack.c.h.b16 %v431
      %v996 = vunpack.c.l.b16 %v432
      %v997 = vunpack.c.l.b16 %v433
      %v998 = vunpack.c.h.b16 %v433
      %v999 = vunpack.c.l.b16 %v434
      %v1000 = vunpack.c.l.b16 %v435
      %v1001 = vunpack.c.h.b16 %v435
      %v1002 = vunpack.c.l.b16 %v436
      %v1003 = vunpack.c.l.b16 %v437
      %v1004 = vunpack.c.h.b16 %v437
      %v1005 = vunpack.c.l.b16 %v438
      %v1006 = vunpack.c.l.b16 %v439
      %v1007 = vunpack.c.h.b16 %v439
      %v1008 = vunpack.c.l.b16 %v440
      %v1009 = vunpack.c.l.b16 %v441
      %v1010 = vunpack.c.h.b16 %v441
      %v1011 = vunpack.c.l.b16 %v442
      %v1012 = vunpack.c.l.b16 %v443
      %v1013 = vunpack.c.h.b16 %v443
      %v1014 = vunpack.c.l.b16 %v444
      %v1015 = vunpack.c.l.b16 %v445
      %v1016 = vunpack.c.h.b16 %v445
      %v1017 = vunpack.c.l.b16 %v446
      %v1018 = vunpack.c.l.b16 %v447
      %v1019 = vunpack.c.h.b16 %v447
      %v1020 = vunpack.c.l.b16 %v448
      %v1021 = vunpack.c.l.b16 %v449
      %v1022 = vunpack.c.h.b16 %v449
      %v1023 = vunpack.c.l.b16 %v450
      %v1024 = vunpack.c.l.b16 %v451
      %v1025 = vunpack.c.h.b16 %v451
      %v1026 = vunpack.c.l.b16 %v452
      %v1027 = vunpack.c.l.b16 %v453
      %v1028 = vunpack.c.h.b16 %v453
      %v1029 = vunpack.c.l.b16 %v454
      %v1030 = vunpack.c.l.b16 %v455
      %v1031 = vunpack.c.h.b16 %v455
      %v1032 = vunpack.c.l.b16 %v456
      %v1033 = vunpack.c.l.b16 %v457
      %v1034 = vunpack.c.h.b16 %v457
      %v1035 = vunpack.c.l.b16 %v458
      %v1036 = vunpack.c.l.b16 %v459
      %v1037 = vunpack.c.h.b16 %v459
      %v1038 = vunpack.c.l.b16 %v460
      %v1039 = vunpack.c.l.b16 %v461
      %v1040 = vunpack.c.h.b16 %v461
      %v1041 = vunpack.c.l.b16 %v462
      %v1042 = vunpack.c.l.b16 %v463
      %v1043 = vunpack.c.h.b16 %v463
      %v1044 = vunpack.c.l.b16 %v464
      %v1045 = vunpack.c.l.b16 %v465
      %v1046 = vunpack.c.h.b16 %v465
      %v1047 = vunpack.c.l.b16 %v466
      %v1048 = vunpack.c.l.b16 %v467
      %v1049 = vunpack.c.h.b16 %v467
      %v1050 = vunpack.c.l.b16 %v468
      %v1051 = vunpack.c.l.b16 %v469
      %v1052 = vunpack.c.h.b16 %v469
      %v1053 = vunpack.c.l.b16 %v470
      %v1054 = vunpack.c.l.b16 %v471
      %v1055 = vunpack.c.h.b16 %v471
      %v1056 = vunpack.c.l.b16 %v472
      %v1057 = vunpack.c.l.b16 %v473
      %v1058 = vunpack.c.h.b16 %v473
      %v1059 = vunpack.c.l.b16 %v474
      %v1060 = vunpack.c.l.b16 %v475
      %v1061 = vunpack.c.h.b16 %v475
      %v1062 = vunpack.c.l.b16 %v476
      %v1063 = vpack.c.b16 %v874, %v871
      %v1064 = vpack.c.b16 %v875, %v872
      %v1065 = vpack.c.b16 %v876, %v873
      %v1066 = vpack.c.b16 %v880, %v877
      %v1067 = vpack.c.b16 %v881, %v878
      %v1068 = vpack.c.b16 %v882, %v879
      %v1069 = vpack.c.b16 %v886, %v883
      %v1070 = vpack.c.b16 %v887, %v884
      %v1071 = vpack.c.b16 %v888, %v885
      %v1072 = vpack.c.b16 %v892, %v889
      %v1073 = vpack.c.b16 %v893, %v890
      %v1074 = vpack.c.b16 %v894, %v891
      %v1075 = vpack.c.b16 %v898, %v895
      %v1076 = vpack.c.b16 %v899, %v896
      %v1077 = vpack.c.b16 %v900, %v897
      %v1078 = vpack.c.b16 %v904, %v901
      %v1079 = vpack.c.b16 %v905, %v902
      %v1080 = vpack.c.b16 %v906, %v903
      %v1081 = vpack.c.b16 %v910, %v907
      %v1082 = vpack.c.b16 %v911, %v908
      %v1083 = vpack.c.b16 %v912, %v909
      %v1084 = vpack.c.b16 %v916, %v913
      %v1085 = vpack.c.b16 %v917, %v914
      %v1086 = vpack.c.b16 %v918, %v915
      %v1087 = vpack.c.b16 %v922, %v919
      %v1088 = vpack.c.b16 %v923, %v920
      %v1089 = vpack.c.b16 %v924, %v921
      %v1090 = vpack.c.b16 %v928, %v925
      %v1091 = vpack.c.b16 %v929, %v926
      %v1092 = vpack.c.b16 %v930, %v927
      %v1093 = vpack.c.b16 %v934, %v931
      %v1094 = vpack.c.b16 %v935, %v932
      %v1095 = vpack.c.b16 %v936, %v933
      %v1096 = vpack.c.b16 %v940, %v937
      %v1097 = vpack.c.b16 %v941, %v938
      %v1098 = vpack.c.b16 %v942, %v939
      %v1099 = vpack.c.b16 %v946, %v943
      %v1100 = vpack.c.b16 %v947, %v944
      %v1101 = vpack.c.b16 %v948, %v945
      %v1102 = vpack.c.b16 %v952, %v949
      %v1103 = vpack.c.b16 %v953, %v950
      %v1104 = vpack.c.b16 %v954, %v951
      %v1105 = vpack.c.b16 %v958, %v955
      %v1106 = vpack.c.b16 %v959, %v956
      %v1107 = vpack.c.b16 %v960, %v957
      %v1108 = vpack.c.b16 %v964, %v961
      %v1109 = vpack.c.b16 %v965, %v962
      %v1110 = vpack.c.b16 %v966, %v963
      %v1111 = vpack.c.b16 %v970, %v967
      %v1112 = vpack.c.b16 %v971, %v968
      %v1113 = vpack.c.b16 %v972, %v969
      %v1114 = vpack.c.b16 %v976, %v973
      %v1115 = vpack.c.b16 %v977, %v974
      %v1116 = vpack.c.b16 %v978, %v975
      %v1117 = vpack.c.b16 %v982, %v979
      %v1118 = vpack.c.b16 %v983, %v980
      %v1119 = vpack.c.b16 %v984, %v981
      %v1120 = vpack.c.b16 %v988, %v985
      %v1121 = vpack.c.b16 %v989, %v986
      %v1122 = vpack.c.b16 %v990, %v987
      %v1123 = vpack.c.b16 %v994, %v991
      %v1124 = vpack.c.b16 %v995, %v992
      %v1125 = vpack.c.b16 %v996, %v993
      %v1126 = vpack.c.b16 %v1000, %v997
      %v1127 = vpack.c.b16 %v1001, %v998
      %v1128 = vpack.c.b16 %v1002, %v999
      %v1129 = vpack.c.b16 %v1006, %v1003
      %v1130 = vpack.c.b16 %v1007, %v1004
      %v1131 = vpack.c.b16 %v1008, %v1005
      %v1132 = vpack.c.b16 %v1012, %v1009
      %v1133 = vpack.c.b16 %v1013, %v1010
      %v1134 = vpack.c.b16 %v1014, %v1011
      %v1135 = vpack.c.b16 %v1018, %v1015
      %v1136 = vpack.c.b16 %v1019, %v1016
      %v1137 = vpack.c.b16 %v1020, %v1017
      %v1138 = vpack.c.b16 %v1024, %v1021
      %v1139 = vpack.c.b16 %v1025, %v1022
      %v1140 = vpack.c.b16 %v1026, %v1023
      %v1141 = vpack.c.b16 %v1030, %v1027
      %v1142 = vpack.c.b16 %v1031, %v1028
      %v1143 = vpack.c.b16 %v1032, %v1029
      %v1144 = vpack.c.b16 %v1036, %v1033
      %v1145 = vpack.c.b16 %v1037, %v1034
      %v1146 = vpack.c.b16 %v1038, %v1035
      %v1147 = vpack.c.b16 %v1042, %v1039
      %v1148 = vpack.c.b16 %v1043, %v1040
      %v1149 = vpack.c.b16 %v1044, %v1041
      %v1150 = vpack.c.b16 %v1048, %v1045
      %v1151 = vpack.c.b16 %v1049, %v1046
      %v1152 = vpack.c.b16 %v1050, %v1047
      %v1153 = vpack.c.b16 %v1054, %v1051
      %v1154 = vpack.c.b16 %v1055, %v1052
      %v1155 = vpack.c.b16 %v1056, %v1053
      %v1156 = vpack.c.b16 %v1060, %v1057
      %v1157 = vpack.c.b16 %v1061, %v1058
      %v1158 = vpack.c.b16 %v1062, %v1059
      %1255 = vmatpush.bf16.xpose.msra.mxu0 %v1084
      %1256 = vmatpush.bf16.xpose.msra.mxu0 %v1081
      %1257 = vmatpush.bf16.xpose.msra.mxu0 %v1078
      %1258 = vmatpush.bf16.xpose.msra.mxu0 %v1075
      %1259 = vmatpush.bf16.xpose.msra.mxu0 %v1072
      %1260 = vmatpush.bf16.xpose.msra.mxu0 %v1069
      %1261 = vmatpush.bf16.xpose.msra.mxu0 %v1066
      %1262 = vmatpush.bf16.xpose.msra.mxu0 %v1063
      %1263 = vmatmul.bf16.gmra.mxu0 %v647
      %v1264 = vpop.f32.mrf.mxu0
      %v1265 = vadd.f32 %v479, %v1264
      %v1266 = vpop.f32.mrf.mxu0
      %v1267 = vadd.f32 %v479, %v1266
      %1268 = vmatmul.bf16.gmra.mxu0 %v650
      %v1269 = vpop.f32.mrf.mxu0
      %v1270 = vadd.f32 %v479, %v1269
      %v1271 = vpop.f32.mrf.mxu0
      %v1272 = vadd.f32 %v479, %v1271
      %1273 = vmatmul.bf16.gmra.mxu0 %v653
      %v1274 = vpop.f32.mrf.mxu0
      %v1275 = vadd.f32 %v479, %v1274
      %v1276 = vpop.f32.mrf.mxu0
      %v1277 = vadd.f32 %v479, %v1276
      %1278 = vmatmul.bf16.gmra.mxu0 %v656
      %v1279 = vpop.f32.mrf.mxu0
      %v1280 = vadd.f32 %v479, %v1279
      %v1281 = vpop.f32.mrf.mxu0
      %v1282 = vadd.f32 %v479, %v1281
      %1283 = vmatmul.bf16.gmra.mxu0 %v659
      %v1284 = vpop.f32.mrf.mxu0
      %v1285 = vadd.f32 %v479, %v1284
      %v1286 = vpop.f32.mrf.mxu0
      %v1287 = vadd.f32 %v479, %v1286
      %1288 = vmatmul.bf16.gmra.mxu0 %v662
      %v1289 = vpop.f32.mrf.mxu0
      %v1290 = vadd.f32 %v479, %v1289
      %v1291 = vpop.f32.mrf.mxu0
      %v1292 = vadd.f32 %v479, %v1291
      %1293 = vmatmul.bf16.gmra.mxu0 %v665
      %v1294 = vpop.f32.mrf.mxu0
      %v1295 = vadd.f32 %v479, %v1294
      %v1296 = vpop.f32.mrf.mxu0
      %v1297 = vadd.f32 %v479, %v1296
      %1298 = vmatmul.bf16.gmra.mxu0 %v668
      %v1299 = vpop.f32.mrf.mxu0
      %v1300 = vadd.f32 %v479, %v1299
      %v1301 = vpop.f32.mrf.mxu0
      %v1302 = vadd.f32 %v479, %v1301
      %1303 = vmatmul.bf16.gmra.mxu0 %v671
      %v1304 = vpop.f32.mrf.mxu0
      %v1305 = vadd.f32 %v479, %v1304
      %v1306 = vpop.f32.mrf.mxu0
      %v1307 = vadd.f32 %v479, %v1306
      %1308 = vmatmul.bf16.gmra.mxu0 %v674
      %v1309 = vpop.f32.mrf.mxu0
      %v1310 = vadd.f32 %v479, %v1309
      %v1311 = vpop.f32.mrf.mxu0
      %v1312 = vadd.f32 %v479, %v1311
      %1313 = vmatmul.bf16.gmra.mxu0 %v677
      %v1314 = vpop.f32.mrf.mxu0
      %v1315 = vadd.f32 %v479, %v1314
      %v1316 = vpop.f32.mrf.mxu0
      %v1317 = vadd.f32 %v479, %v1316
      %1318 = vmatmul.bf16.gmra.mxu0 %v680
      %v1319 = vpop.f32.mrf.mxu0
      %v1320 = vadd.f32 %v479, %v1319
      %v1321 = vpop.f32.mrf.mxu0
      %v1322 = vadd.f32 %v479, %v1321
      %1323 = vmatmul.bf16.gmra.mxu0 %v683
      %v1324 = vpop.f32.mrf.mxu0
      %v1325 = vadd.f32 %v479, %v1324
      %v1326 = vpop.f32.mrf.mxu0
      %v1327 = vadd.f32 %v479, %v1326
      %1328 = vmatmul.bf16.gmra.mxu0 %v686
      %v1329 = vpop.f32.mrf.mxu0
      %v1330 = vadd.f32 %v479, %v1329
      %v1331 = vpop.f32.mrf.mxu0
      %v1332 = vadd.f32 %v479, %v1331
      %1333 = vmatmul.bf16.gmra.mxu0 %v689
      %v1334 = vpop.f32.mrf.mxu0
      %v1335 = vadd.f32 %v479, %v1334
      %v1336 = vpop.f32.mrf.mxu0
      %v1337 = vadd.f32 %v479, %v1336
      %1338 = vmatmul.bf16.gmra.mxu0 %v692
      %v1339 = vpop.f32.mrf.mxu0
      %v1340 = vadd.f32 %v479, %v1339
      %v1341 = vpop.f32.mrf.mxu0
      %v1342 = vadd.f32 %v479, %v1341
      %1343 = vdwg.mxu0
      %1344 = vmatpush.bf16.xpose.msra.mxu0 %v1085
      %1345 = vmatpush.bf16.xpose.msra.mxu0 %v1082
      %1346 = vmatpush.bf16.xpose.msra.mxu0 %v1079
      %1347 = vmatpush.bf16.xpose.msra.mxu0 %v1076
      %1348 = vmatpush.bf16.xpose.msra.mxu0 %v1073
      %1349 = vmatpush.bf16.xpose.msra.mxu0 %v1070
      %1350 = vmatpush.bf16.xpose.msra.mxu0 %v1067
      %1351 = vmatpush.bf16.xpose.msra.mxu0 %v1064
      %1352 = vmatmul.bf16.gmra.mxu0 %v648
      %v1353 = vpop.f32.mrf.mxu0
      %v1354 = vadd.f32 %v1265, %v1353
      %v1355 = vpop.f32.mrf.mxu0
      %v1356 = vadd.f32 %v1267, %v1355
      %1357 = vmatmul.bf16.gmra.mxu0 %v651
      %v1358 = vpop.f32.mrf.mxu0
      %v1359 = vadd.f32 %v1270, %v1358
      %v1360 = vpop.f32.mrf.mxu0
      %v1361 = vadd.f32 %v1272, %v1360
      %1362 = vmatmul.bf16.gmra.mxu0 %v654
      %v1363 = vpop.f32.mrf.mxu0
      %v1364 = vadd.f32 %v1275, %v1363
      %v1365 = vpop.f32.mrf.mxu0
      %v1366 = vadd.f32 %v1277, %v1365
      %1367 = vmatmul.bf16.gmra.mxu0 %v657
      %v1368 = vpop.f32.mrf.mxu0
      %v1369 = vadd.f32 %v1280, %v1368
      %v1370 = vpop.f32.mrf.mxu0
      %v1371 = vadd.f32 %v1282, %v1370
      %1372 = vmatmul.bf16.gmra.mxu0 %v660
      %v1373 = vpop.f32.mrf.mxu0
      %v1374 = vadd.f32 %v1285, %v1373
      %v1375 = vpop.f32.mrf.mxu0
      %v1376 = vadd.f32 %v1287, %v1375
      %1377 = vmatmul.bf16.gmra.mxu0 %v663
      %v1378 = vpop.f32.mrf.mxu0
      %v1379 = vadd.f32 %v1290, %v1378
      %v1380 = vpop.f32.mrf.mxu0
      %v1381 = vadd.f32 %v1292, %v1380
      %1382 = vmatmul.bf16.gmra.mxu0 %v666
      %v1383 = vpop.f32.mrf.mxu0
      %v1384 = vadd.f32 %v1295, %v1383
      %v1385 = vpop.f32.mrf.mxu0
      %v1386 = vadd.f32 %v1297, %v1385
      %1387 = vmatmul.bf16.gmra.mxu0 %v669
      %v1388 = vpop.f32.mrf.mxu0
      %v1389 = vadd.f32 %v1300, %v1388
      %v1390 = vpop.f32.mrf.mxu0
      %v1391 = vadd.f32 %v1302, %v1390
      %1392 = vmatmul.bf16.gmra.mxu0 %v672
      %v1393 = vpop.f32.mrf.mxu0
      %v1394 = vadd.f32 %v1305, %v1393
      %v1395 = vpop.f32.mrf.mxu0
      %v1396 = vadd.f32 %v1307, %v1395
      %1397 = vmatmul.bf16.gmra.mxu0 %v675
      %v1398 = vpop.f32.mrf.mxu0
      %v1399 = vadd.f32 %v1310, %v1398
      %v1400 = vpop.f32.mrf.mxu0
      %v1401 = vadd.f32 %v1312, %v1400
      %1402 = vmatmul.bf16.gmra.mxu0 %v678
      %v1403 = vpop.f32.mrf.mxu0
      %v1404 = vadd.f32 %v1315, %v1403
      %v1405 = vpop.f32.mrf.mxu0
      %v1406 = vadd.f32 %v1317, %v1405
      %1407 = vmatmul.bf16.gmra.mxu0 %v681
      %v1408 = vpop.f32.mrf.mxu0
      %v1409 = vadd.f32 %v1320, %v1408
      %v1410 = vpop.f32.mrf.mxu0
      %v1411 = vadd.f32 %v1322, %v1410
      %1412 = vmatmul.bf16.gmra.mxu0 %v684
      %v1413 = vpop.f32.mrf.mxu0
      %v1414 = vadd.f32 %v1325, %v1413
      %v1415 = vpop.f32.mrf.mxu0
      %v1416 = vadd.f32 %v1327, %v1415
      %1417 = vmatmul.bf16.gmra.mxu0 %v687
      %v1418 = vpop.f32.mrf.mxu0
      %v1419 = vadd.f32 %v1330, %v1418
      %v1420 = vpop.f32.mrf.mxu0
      %v1421 = vadd.f32 %v1332, %v1420
      %1422 = vmatmul.bf16.gmra.mxu0 %v690
      %v1423 = vpop.f32.mrf.mxu0
      %v1424 = vadd.f32 %v1335, %v1423
      %v1425 = vpop.f32.mrf.mxu0
      %v1426 = vadd.f32 %v1337, %v1425
      %1427 = vmatmul.bf16.gmra.mxu0 %v693
      %v1428 = vpop.f32.mrf.mxu0
      %v1429 = vadd.f32 %v1340, %v1428
      %v1430 = vpop.f32.mrf.mxu0
      %v1431 = vadd.f32 %v1342, %v1430
      %1432 = vdwg.mxu0
      %1433 = vmatpush.bf16.xpose.msra.mxu0 %v1086
      %1434 = vmatpush.bf16.xpose.msra.mxu0 %v1083
      %1435 = vmatpush.bf16.xpose.msra.mxu0 %v1080
      %1436 = vmatpush.bf16.xpose.msra.mxu0 %v1077
      %1437 = vmatpush.bf16.xpose.msra.mxu0 %v1074
      %1438 = vmatpush.bf16.xpose.msra.mxu0 %v1071
      %1439 = vmatpush.bf16.xpose.msra.mxu0 %v1068
      %1440 = vmatpush.bf16.xpose.msra.mxu0 %v1065
      %1441 = vmatmul.bf16.gmra.mxu0 %v649
      %v1442 = vpop.f32.mrf.mxu0
      %v1443 = vadd.f32 %v1354, %v1442
      %v1444 = vpop.f32.mrf.mxu0
      %v1445 = vadd.f32 %v1356, %v1444
      %1446 = vmatmul.bf16.gmra.mxu0 %v652
      %v1447 = vpop.f32.mrf.mxu0
      %v1448 = vadd.f32 %v1359, %v1447
      %v1449 = vpop.f32.mrf.mxu0
      %v1450 = vadd.f32 %v1361, %v1449
      %1451 = vmatmul.bf16.gmra.mxu0 %v655
      %v1452 = vpop.f32.mrf.mxu0
      %v1453 = vadd.f32 %v1364, %v1452
      %v1454 = vpop.f32.mrf.mxu0
      %v1455 = vadd.f32 %v1366, %v1454
      %1456 = vmatmul.bf16.gmra.mxu0 %v658
      %v1457 = vpop.f32.mrf.mxu0
      %v1458 = vadd.f32 %v1369, %v1457
      %v1459 = vpop.f32.mrf.mxu0
      %v1460 = vadd.f32 %v1371, %v1459
      %1461 = vmatmul.bf16.gmra.mxu0 %v661
      %v1462 = vpop.f32.mrf.mxu0
      %v1463 = vadd.f32 %v1374, %v1462
      %v1464 = vpop.f32.mrf.mxu0
      %v1465 = vadd.f32 %v1376, %v1464
      %1466 = vmatmul.bf16.gmra.mxu0 %v664
      %v1467 = vpop.f32.mrf.mxu0
      %v1468 = vadd.f32 %v1379, %v1467
      %v1469 = vpop.f32.mrf.mxu0
      %v1470 = vadd.f32 %v1381, %v1469
      %1471 = vmatmul.bf16.gmra.mxu0 %v667
      %v1472 = vpop.f32.mrf.mxu0
      %v1473 = vadd.f32 %v1384, %v1472
      %v1474 = vpop.f32.mrf.mxu0
      %v1475 = vadd.f32 %v1386, %v1474
      %1476 = vmatmul.bf16.gmra.mxu0 %v670
      %v1477 = vpop.f32.mrf.mxu0
      %v1478 = vadd.f32 %v1389, %v1477
      %v1479 = vpop.f32.mrf.mxu0
      %v1480 = vadd.f32 %v1391, %v1479
      %1481 = vmatmul.bf16.gmra.mxu0 %v673
      %v1482 = vpop.f32.mrf.mxu0
      %v1483 = vadd.f32 %v1394, %v1482
      %v1484 = vpop.f32.mrf.mxu0
      %v1485 = vadd.f32 %v1396, %v1484
      %1486 = vmatmul.bf16.gmra.mxu0 %v676
      %v1487 = vpop.f32.mrf.mxu0
      %v1488 = vadd.f32 %v1399, %v1487
      %v1489 = vpop.f32.mrf.mxu0
      %v1490 = vadd.f32 %v1401, %v1489
      %1491 = vmatmul.bf16.gmra.mxu0 %v679
      %v1492 = vpop.f32.mrf.mxu0
      %v1493 = vadd.f32 %v1404, %v1492
      %v1494 = vpop.f32.mrf.mxu0
      %v1495 = vadd.f32 %v1406, %v1494
      %1496 = vmatmul.bf16.gmra.mxu0 %v682
      %v1497 = vpop.f32.mrf.mxu0
      %v1498 = vadd.f32 %v1409, %v1497
      %v1499 = vpop.f32.mrf.mxu0
      %v1500 = vadd.f32 %v1411, %v1499
      %1501 = vmatmul.bf16.gmra.mxu0 %v685
      %v1502 = vpop.f32.mrf.mxu0
      %v1503 = vadd.f32 %v1414, %v1502
      %v1504 = vpop.f32.mrf.mxu0
      %v1505 = vadd.f32 %v1416, %v1504
      %1506 = vmatmul.bf16.gmra.mxu0 %v688
      %v1507 = vpop.f32.mrf.mxu0
      %v1508 = vadd.f32 %v1419, %v1507
      %v1509 = vpop.f32.mrf.mxu0
      %v1510 = vadd.f32 %v1421, %v1509
      %1511 = vmatmul.bf16.gmra.mxu0 %v691
      %v1512 = vpop.f32.mrf.mxu0
      %v1513 = vadd.f32 %v1424, %v1512
      %v1514 = vpop.f32.mrf.mxu0
      %v1515 = vadd.f32 %v1426, %v1514
      %1516 = vmatmul.bf16.gmra.mxu0 %v694
      %v1517 = vpop.f32.mrf.mxu0
      %v1518 = vadd.f32 %v1429, %v1517
      %v1519 = vpop.f32.mrf.mxu0
      %v1520 = vadd.f32 %v1431, %v1519
      %1521 = vdwg.mxu0
      %1522 = vmatpush.bf16.xpose.msra.mxu0 %v1108
      %1523 = vmatpush.bf16.xpose.msra.mxu0 %v1105
      %1524 = vmatpush.bf16.xpose.msra.mxu0 %v1102
      %1525 = vmatpush.bf16.xpose.msra.mxu0 %v1099
      %1526 = vmatpush.bf16.xpose.msra.mxu0 %v1096
      %1527 = vmatpush.bf16.xpose.msra.mxu0 %v1093
      %1528 = vmatpush.bf16.xpose.msra.mxu0 %v1090
      %1529 = vmatpush.bf16.xpose.msra.mxu0 %v1087
      %1530 = vmatmul.bf16.gmra.mxu0 %v647
      %v1531 = vpop.f32.mrf.mxu0
      %v1532 = vadd.f32 %v480, %v1531
      %v1533 = vpop.f32.mrf.mxu0
      %v1534 = vadd.f32 %v480, %v1533
      %1535 = vmatmul.bf16.gmra.mxu0 %v650
      %v1536 = vpop.f32.mrf.mxu0
      %v1537 = vadd.f32 %v480, %v1536
      %v1538 = vpop.f32.mrf.mxu0
      %v1539 = vadd.f32 %v480, %v1538
      %1540 = vmatmul.bf16.gmra.mxu0 %v653
      %v1541 = vpop.f32.mrf.mxu0
      %v1542 = vadd.f32 %v480, %v1541
      %v1543 = vpop.f32.mrf.mxu0
      %v1544 = vadd.f32 %v480, %v1543
      %1545 = vmatmul.bf16.gmra.mxu0 %v656
      %v1546 = vpop.f32.mrf.mxu0
      %v1547 = vadd.f32 %v480, %v1546
      %v1548 = vpop.f32.mrf.mxu0
      %v1549 = vadd.f32 %v480, %v1548
      %1550 = vmatmul.bf16.gmra.mxu0 %v659
      %v1551 = vpop.f32.mrf.mxu0
      %v1552 = vadd.f32 %v480, %v1551
      %v1553 = vpop.f32.mrf.mxu0
      %v1554 = vadd.f32 %v480, %v1553
      %1555 = vmatmul.bf16.gmra.mxu0 %v662
      %v1556 = vpop.f32.mrf.mxu0
      %v1557 = vadd.f32 %v480, %v1556
      %v1558 = vpop.f32.mrf.mxu0
      %v1559 = vadd.f32 %v480, %v1558
      %1560 = vmatmul.bf16.gmra.mxu0 %v665
      %v1561 = vpop.f32.mrf.mxu0
      %v1562 = vadd.f32 %v480, %v1561
      %v1563 = vpop.f32.mrf.mxu0
      %v1564 = vadd.f32 %v480, %v1563
      %1565 = vmatmul.bf16.gmra.mxu0 %v668
      %v1566 = vpop.f32.mrf.mxu0
      %v1567 = vadd.f32 %v480, %v1566
      %v1568 = vpop.f32.mrf.mxu0
      %v1569 = vadd.f32 %v480, %v1568
      %1570 = vmatmul.bf16.gmra.mxu0 %v671
      %v1571 = vpop.f32.mrf.mxu0
      %v1572 = vadd.f32 %v480, %v1571
      %v1573 = vpop.f32.mrf.mxu0
      %v1574 = vadd.f32 %v480, %v1573
      %1575 = vmatmul.bf16.gmra.mxu0 %v674
      %v1576 = vpop.f32.mrf.mxu0
      %v1577 = vadd.f32 %v480, %v1576
      %v1578 = vpop.f32.mrf.mxu0
      %v1579 = vadd.f32 %v480, %v1578
      %1580 = vmatmul.bf16.gmra.mxu0 %v677
      %v1581 = vpop.f32.mrf.mxu0
      %v1582 = vadd.f32 %v480, %v1581
      %v1583 = vpop.f32.mrf.mxu0
      %v1584 = vadd.f32 %v480, %v1583
      %1585 = vmatmul.bf16.gmra.mxu0 %v680
      %v1586 = vpop.f32.mrf.mxu0
      %v1587 = vadd.f32 %v480, %v1586
      %v1588 = vpop.f32.mrf.mxu0
      %v1589 = vadd.f32 %v480, %v1588
      %1590 = vmatmul.bf16.gmra.mxu0 %v683
      %v1591 = vpop.f32.mrf.mxu0
      %v1592 = vadd.f32 %v480, %v1591
      %v1593 = vpop.f32.mrf.mxu0
      %v1594 = vadd.f32 %v480, %v1593
      %1595 = vmatmul.bf16.gmra.mxu0 %v686
      %v1596 = vpop.f32.mrf.mxu0
      %v1597 = vadd.f32 %v480, %v1596
      %v1598 = vpop.f32.mrf.mxu0
      %v1599 = vadd.f32 %v480, %v1598
      %1600 = vmatmul.bf16.gmra.mxu0 %v689
      %v1601 = vpop.f32.mrf.mxu0
      %v1602 = vadd.f32 %v480, %v1601
      %v1603 = vpop.f32.mrf.mxu0
      %v1604 = vadd.f32 %v480, %v1603
      %1605 = vmatmul.bf16.gmra.mxu0 %v692
      %v1606 = vpop.f32.mrf.mxu0
      %v1607 = vadd.f32 %v480, %v1606
      %v1608 = vpop.f32.mrf.mxu0
      %v1609 = vadd.f32 %v480, %v1608
      %1610 = vdwg.mxu0
      %1611 = vmatpush.bf16.xpose.msra.mxu0 %v1109
      %1612 = vmatpush.bf16.xpose.msra.mxu0 %v1106
      %1613 = vmatpush.bf16.xpose.msra.mxu0 %v1103
      %1614 = vmatpush.bf16.xpose.msra.mxu0 %v1100
      %1615 = vmatpush.bf16.xpose.msra.mxu0 %v1097
      %1616 = vmatpush.bf16.xpose.msra.mxu0 %v1094
      %1617 = vmatpush.bf16.xpose.msra.mxu0 %v1091
      %1618 = vmatpush.bf16.xpose.msra.mxu0 %v1088
      %1619 = vmatmul.bf16.gmra.mxu0 %v648
      %v1620 = vpop.f32.mrf.mxu0
      %v1621 = vadd.f32 %v1532, %v1620
      %v1622 = vpop.f32.mrf.mxu0
      %v1623 = vadd.f32 %v1534, %v1622
      %1624 = vmatmul.bf16.gmra.mxu0 %v651
      %v1625 = vpop.f32.mrf.mxu0
      %v1626 = vadd.f32 %v1537, %v1625
      %v1627 = vpop.f32.mrf.mxu0
      %v1628 = vadd.f32 %v1539, %v1627
      %1629 = vmatmul.bf16.gmra.mxu0 %v654
      %v1630 = vpop.f32.mrf.mxu0
      %v1631 = vadd.f32 %v1542, %v1630
      %v1632 = vpop.f32.mrf.mxu0
      %v1633 = vadd.f32 %v1544, %v1632
      %1634 = vmatmul.bf16.gmra.mxu0 %v657
      %v1635 = vpop.f32.mrf.mxu0
      %v1636 = vadd.f32 %v1547, %v1635
      %v1637 = vpop.f32.mrf.mxu0
      %v1638 = vadd.f32 %v1549, %v1637
      %1639 = vmatmul.bf16.gmra.mxu0 %v660
      %v1640 = vpop.f32.mrf.mxu0
      %v1641 = vadd.f32 %v1552, %v1640
      %v1642 = vpop.f32.mrf.mxu0
      %v1643 = vadd.f32 %v1554, %v1642
      %1644 = vmatmul.bf16.gmra.mxu0 %v663
      %v1645 = vpop.f32.mrf.mxu0
      %v1646 = vadd.f32 %v1557, %v1645
      %v1647 = vpop.f32.mrf.mxu0
      %v1648 = vadd.f32 %v1559, %v1647
      %1649 = vmatmul.bf16.gmra.mxu0 %v666
      %v1650 = vpop.f32.mrf.mxu0
      %v1651 = vadd.f32 %v1562, %v1650
      %v1652 = vpop.f32.mrf.mxu0
      %v1653 = vadd.f32 %v1564, %v1652
      %1654 = vmatmul.bf16.gmra.mxu0 %v669
      %v1655 = vpop.f32.mrf.mxu0
      %v1656 = vadd.f32 %v1567, %v1655
      %v1657 = vpop.f32.mrf.mxu0
      %v1658 = vadd.f32 %v1569, %v1657
      %1659 = vmatmul.bf16.gmra.mxu0 %v672
      %v1660 = vpop.f32.mrf.mxu0
      %v1661 = vadd.f32 %v1572, %v1660
      %v1662 = vpop.f32.mrf.mxu0
      %v1663 = vadd.f32 %v1574, %v1662
      %1664 = vmatmul.bf16.gmra.mxu0 %v675
      %v1665 = vpop.f32.mrf.mxu0
      %v1666 = vadd.f32 %v1577, %v1665
      %v1667 = vpop.f32.mrf.mxu0
      %v1668 = vadd.f32 %v1579, %v1667
      %1669 = vmatmul.bf16.gmra.mxu0 %v678
      %v1670 = vpop.f32.mrf.mxu0
      %v1671 = vadd.f32 %v1582, %v1670
      %v1672 = vpop.f32.mrf.mxu0
      %v1673 = vadd.f32 %v1584, %v1672
      %1674 = vmatmul.bf16.gmra.mxu0 %v681
      %v1675 = vpop.f32.mrf.mxu0
      %v1676 = vadd.f32 %v1587, %v1675
      %v1677 = vpop.f32.mrf.mxu0
      %v1678 = vadd.f32 %v1589, %v1677
      %1679 = vmatmul.bf16.gmra.mxu0 %v684
      %v1680 = vpop.f32.mrf.mxu0
      %v1681 = vadd.f32 %v1592, %v1680
      %v1682 = vpop.f32.mrf.mxu0
      %v1683 = vadd.f32 %v1594, %v1682
      %1684 = vmatmul.bf16.gmra.mxu0 %v687
      %v1685 = vpop.f32.mrf.mxu0
      %v1686 = vadd.f32 %v1597, %v1685
      %v1687 = vpop.f32.mrf.mxu0
      %v1688 = vadd.f32 %v1599, %v1687
      %1689 = vmatmul.bf16.gmra.mxu0 %v690
      %v1690 = vpop.f32.mrf.mxu0
      %v1691 = vadd.f32 %v1602, %v1690
      %v1692 = vpop.f32.mrf.mxu0
      %v1693 = vadd.f32 %v1604, %v1692
      %1694 = vmatmul.bf16.gmra.mxu0 %v693
      %v1695 = vpop.f32.mrf.mxu0
      %v1696 = vadd.f32 %v1607, %v1695
      %v1697 = vpop.f32.mrf.mxu0
      %v1698 = vadd.f32 %v1609, %v1697
      %1699 = vdwg.mxu0
      %1700 = vmatpush.bf16.xpose.msra.mxu0 %v1110
      %1701 = vmatpush.bf16.xpose.msra.mxu0 %v1107
      %1702 = vmatpush.bf16.xpose.msra.mxu0 %v1104
      %1703 = vmatpush.bf16.xpose.msra.mxu0 %v1101
      %1704 = vmatpush.bf16.xpose.msra.mxu0 %v1098
      %1705 = vmatpush.bf16.xpose.msra.mxu0 %v1095
      %1706 = vmatpush.bf16.xpose.msra.mxu0 %v1092
      %1707 = vmatpush.bf16.xpose.msra.mxu0 %v1089
      %1708 = vmatmul.bf16.gmra.mxu0 %v649
      %v1709 = vpop.f32.mrf.mxu0
      %v1710 = vadd.f32 %v1621, %v1709
      %v1711 = vpop.f32.mrf.mxu0
      %v1712 = vadd.f32 %v1623, %v1711
      %1713 = vmatmul.bf16.gmra.mxu0 %v652
      %v1714 = vpop.f32.mrf.mxu0
      %v1715 = vadd.f32 %v1626, %v1714
      %v1716 = vpop.f32.mrf.mxu0
      %v1717 = vadd.f32 %v1628, %v1716
      %1718 = vmatmul.bf16.gmra.mxu0 %v655
      %v1719 = vpop.f32.mrf.mxu0
      %v1720 = vadd.f32 %v1631, %v1719
      %v1721 = vpop.f32.mrf.mxu0
      %v1722 = vadd.f32 %v1633, %v1721
      %1723 = vmatmul.bf16.gmra.mxu0 %v658
      %v1724 = vpop.f32.mrf.mxu0
      %v1725 = vadd.f32 %v1636, %v1724
      %v1726 = vpop.f32.mrf.mxu0
      %v1727 = vadd.f32 %v1638, %v1726
      %1728 = vmatmul.bf16.gmra.mxu0 %v661
      %v1729 = vpop.f32.mrf.mxu0
      %v1730 = vadd.f32 %v1641, %v1729
      %v1731 = vpop.f32.mrf.mxu0
      %v1732 = vadd.f32 %v1643, %v1731
      %1733 = vmatmul.bf16.gmra.mxu0 %v664
      %v1734 = vpop.f32.mrf.mxu0
      %v1735 = vadd.f32 %v1646, %v1734
      %v1736 = vpop.f32.mrf.mxu0
      %v1737 = vadd.f32 %v1648, %v1736
      %1738 = vmatmul.bf16.gmra.mxu0 %v667
      %v1739 = vpop.f32.mrf.mxu0
      %v1740 = vadd.f32 %v1651, %v1739
      %v1741 = vpop.f32.mrf.mxu0
      %v1742 = vadd.f32 %v1653, %v1741
      %1743 = vmatmul.bf16.gmra.mxu0 %v670
      %v1744 = vpop.f32.mrf.mxu0
      %v1745 = vadd.f32 %v1656, %v1744
      %v1746 = vpop.f32.mrf.mxu0
      %v1747 = vadd.f32 %v1658, %v1746
      %1748 = vmatmul.bf16.gmra.mxu0 %v673
      %v1749 = vpop.f32.mrf.mxu0
      %v1750 = vadd.f32 %v1661, %v1749
      %v1751 = vpop.f32.mrf.mxu0
      %v1752 = vadd.f32 %v1663, %v1751
      %1753 = vmatmul.bf16.gmra.mxu0 %v676
      %v1754 = vpop.f32.mrf.mxu0
      %v1755 = vadd.f32 %v1666, %v1754
      %v1756 = vpop.f32.mrf.mxu0
      %v1757 = vadd.f32 %v1668, %v1756
      %1758 = vmatmul.bf16.gmra.mxu0 %v679
      %v1759 = vpop.f32.mrf.mxu0
      %v1760 = vadd.f32 %v1671, %v1759
      %v1761 = vpop.f32.mrf.mxu0
      %v1762 = vadd.f32 %v1673, %v1761
      %1763 = vmatmul.bf16.gmra.mxu0 %v682
      %v1764 = vpop.f32.mrf.mxu0
      %v1765 = vadd.f32 %v1676, %v1764
      %v1766 = vpop.f32.mrf.mxu0
      %v1767 = vadd.f32 %v1678, %v1766
      %1768 = vmatmul.bf16.gmra.mxu0 %v685
      %v1769 = vpop.f32.mrf.mxu0
      %v1770 = vadd.f32 %v1681, %v1769
      %v1771 = vpop.f32.mrf.mxu0
      %v1772 = vadd.f32 %v1683, %v1771
      %1773 = vmatmul.bf16.gmra.mxu0 %v688
      %v1774 = vpop.f32.mrf.mxu0
      %v1775 = vadd.f32 %v1686, %v1774
      %v1776 = vpop.f32.mrf.mxu0
      %v1777 = vadd.f32 %v1688, %v1776
      %1778 = vmatmul.bf16.gmra.mxu0 %v691
      %v1779 = vpop.f32.mrf.mxu0
      %v1780 = vadd.f32 %v1691, %v1779
      %v1781 = vpop.f32.mrf.mxu0
      %v1782 = vadd.f32 %v1693, %v1781
      %1783 = vmatmul.bf16.gmra.mxu0 %v694
      %v1784 = vpop.f32.mrf.mxu0
      %v1785 = vadd.f32 %v1696, %v1784
      %v1786 = vpop.f32.mrf.mxu0
      %v1787 = vadd.f32 %v1698, %v1786
      %1788 = vdwg.mxu0
      %1789 = vmatpush.bf16.xpose.msra.mxu0 %v1132
      %1790 = vmatpush.bf16.xpose.msra.mxu0 %v1129
      %1791 = vmatpush.bf16.xpose.msra.mxu0 %v1126
      %1792 = vmatpush.bf16.xpose.msra.mxu0 %v1123
      %1793 = vmatpush.bf16.xpose.msra.mxu0 %v1120
      %1794 = vmatpush.bf16.xpose.msra.mxu0 %v1117
      %1795 = vmatpush.bf16.xpose.msra.mxu0 %v1114
      %1796 = vmatpush.bf16.xpose.msra.mxu0 %v1111
      %1797 = vmatmul.bf16.gmra.mxu0 %v647
      %v1798 = vpop.f32.mrf.mxu0
      %v1799 = vadd.f32 %v481, %v1798
      %v1800 = vpop.f32.mrf.mxu0
      %v1801 = vadd.f32 %v481, %v1800
      %1802 = vmatmul.bf16.gmra.mxu0 %v650
      %v1803 = vpop.f32.mrf.mxu0
      %v1804 = vadd.f32 %v481, %v1803
      %v1805 = vpop.f32.mrf.mxu0
      %v1806 = vadd.f32 %v481, %v1805
      %1807 = vmatmul.bf16.gmra.mxu0 %v653
      %v1808 = vpop.f32.mrf.mxu0
      %v1809 = vadd.f32 %v481, %v1808
      %v1810 = vpop.f32.mrf.mxu0
      %v1811 = vadd.f32 %v481, %v1810
      %1812 = vmatmul.bf16.gmra.mxu0 %v656
      %v1813 = vpop.f32.mrf.mxu0
      %v1814 = vadd.f32 %v481, %v1813
      %v1815 = vpop.f32.mrf.mxu0
      %v1816 = vadd.f32 %v481, %v1815
      %1817 = vmatmul.bf16.gmra.mxu0 %v659
      %v1818 = vpop.f32.mrf.mxu0
      %v1819 = vadd.f32 %v481, %v1818
      %v1820 = vpop.f32.mrf.mxu0
      %v1821 = vadd.f32 %v481, %v1820
      %1822 = vmatmul.bf16.gmra.mxu0 %v662
      %v1823 = vpop.f32.mrf.mxu0
      %v1824 = vadd.f32 %v481, %v1823
      %v1825 = vpop.f32.mrf.mxu0
      %v1826 = vadd.f32 %v481, %v1825
      %1827 = vmatmul.bf16.gmra.mxu0 %v665
      %v1828 = vpop.f32.mrf.mxu0
      %v1829 = vadd.f32 %v481, %v1828
      %v1830 = vpop.f32.mrf.mxu0
      %v1831 = vadd.f32 %v481, %v1830
      %1832 = vmatmul.bf16.gmra.mxu0 %v668
      %v1833 = vpop.f32.mrf.mxu0
      %v1834 = vadd.f32 %v481, %v1833
      %v1835 = vpop.f32.mrf.mxu0
      %v1836 = vadd.f32 %v481, %v1835
      %1837 = vmatmul.bf16.gmra.mxu0 %v671
      %v1838 = vpop.f32.mrf.mxu0
      %v1839 = vadd.f32 %v481, %v1838
      %v1840 = vpop.f32.mrf.mxu0
      %v1841 = vadd.f32 %v481, %v1840
      %1842 = vmatmul.bf16.gmra.mxu0 %v674
      %v1843 = vpop.f32.mrf.mxu0
      %v1844 = vadd.f32 %v481, %v1843
      %v1845 = vpop.f32.mrf.mxu0
      %v1846 = vadd.f32 %v481, %v1845
      %1847 = vmatmul.bf16.gmra.mxu0 %v677
      %v1848 = vpop.f32.mrf.mxu0
      %v1849 = vadd.f32 %v481, %v1848
      %v1850 = vpop.f32.mrf.mxu0
      %v1851 = vadd.f32 %v481, %v1850
      %1852 = vmatmul.bf16.gmra.mxu0 %v680
      %v1853 = vpop.f32.mrf.mxu0
      %v1854 = vadd.f32 %v481, %v1853
      %v1855 = vpop.f32.mrf.mxu0
      %v1856 = vadd.f32 %v481, %v1855
      %1857 = vmatmul.bf16.gmra.mxu0 %v683
      %v1858 = vpop.f32.mrf.mxu0
      %v1859 = vadd.f32 %v481, %v1858
      %v1860 = vpop.f32.mrf.mxu0
      %v1861 = vadd.f32 %v481, %v1860
      %1862 = vmatmul.bf16.gmra.mxu0 %v686
      %v1863 = vpop.f32.mrf.mxu0
      %v1864 = vadd.f32 %v481, %v1863
      %v1865 = vpop.f32.mrf.mxu0
      %v1866 = vadd.f32 %v481, %v1865
      %1867 = vmatmul.bf16.gmra.mxu0 %v689
      %v1868 = vpop.f32.mrf.mxu0
      %v1869 = vadd.f32 %v481, %v1868
      %v1870 = vpop.f32.mrf.mxu0
      %v1871 = vadd.f32 %v481, %v1870
      %1872 = vmatmul.bf16.gmra.mxu0 %v692
      %v1873 = vpop.f32.mrf.mxu0
      %v1874 = vadd.f32 %v481, %v1873
      %v1875 = vpop.f32.mrf.mxu0
      %v1876 = vadd.f32 %v481, %v1875
      %1877 = vdwg.mxu0
      %1878 = vmatpush.bf16.xpose.msra.mxu0 %v1133
      %1879 = vmatpush.bf16.xpose.msra.mxu0 %v1130
      %1880 = vmatpush.bf16.xpose.msra.mxu0 %v1127
      %1881 = vmatpush.bf16.xpose.msra.mxu0 %v1124
      %1882 = vmatpush.bf16.xpose.msra.mxu0 %v1121
      %1883 = vmatpush.bf16.xpose.msra.mxu0 %v1118
      %1884 = vmatpush.bf16.xpose.msra.mxu0 %v1115
      %1885 = vmatpush.bf16.xpose.msra.mxu0 %v1112
      %1886 = vmatmul.bf16.gmra.mxu0 %v648
      %v1887 = vpop.f32.mrf.mxu0
      %v1888 = vadd.f32 %v1799, %v1887
      %v1889 = vpop.f32.mrf.mxu0
      %v1890 = vadd.f32 %v1801, %v1889
      %1891 = vmatmul.bf16.gmra.mxu0 %v651
      %v1892 = vpop.f32.mrf.mxu0
      %v1893 = vadd.f32 %v1804, %v1892
      %v1894 = vpop.f32.mrf.mxu0
      %v1895 = vadd.f32 %v1806, %v1894
      %1896 = vmatmul.bf16.gmra.mxu0 %v654
      %v1897 = vpop.f32.mrf.mxu0
      %v1898 = vadd.f32 %v1809, %v1897
      %v1899 = vpop.f32.mrf.mxu0
      %v1900 = vadd.f32 %v1811, %v1899
      %1901 = vmatmul.bf16.gmra.mxu0 %v657
      %v1902 = vpop.f32.mrf.mxu0
      %v1903 = vadd.f32 %v1814, %v1902
      %v1904 = vpop.f32.mrf.mxu0
      %v1905 = vadd.f32 %v1816, %v1904
      %1906 = vmatmul.bf16.gmra.mxu0 %v660
      %v1907 = vpop.f32.mrf.mxu0
      %v1908 = vadd.f32 %v1819, %v1907
      %v1909 = vpop.f32.mrf.mxu0
      %v1910 = vadd.f32 %v1821, %v1909
      %1911 = vmatmul.bf16.gmra.mxu0 %v663
      %v1912 = vpop.f32.mrf.mxu0
      %v1913 = vadd.f32 %v1824, %v1912
      %v1914 = vpop.f32.mrf.mxu0
      %v1915 = vadd.f32 %v1826, %v1914
      %1916 = vmatmul.bf16.gmra.mxu0 %v666
      %v1917 = vpop.f32.mrf.mxu0
      %v1918 = vadd.f32 %v1829, %v1917
      %v1919 = vpop.f32.mrf.mxu0
      %v1920 = vadd.f32 %v1831, %v1919
      %1921 = vmatmul.bf16.gmra.mxu0 %v669
      %v1922 = vpop.f32.mrf.mxu0
      %v1923 = vadd.f32 %v1834, %v1922
      %v1924 = vpop.f32.mrf.mxu0
      %v1925 = vadd.f32 %v1836, %v1924
      %1926 = vmatmul.bf16.gmra.mxu0 %v672
      %v1927 = vpop.f32.mrf.mxu0
      %v1928 = vadd.f32 %v1839, %v1927
      %v1929 = vpop.f32.mrf.mxu0
      %v1930 = vadd.f32 %v1841, %v1929
      %1931 = vmatmul.bf16.gmra.mxu0 %v675
      %v1932 = vpop.f32.mrf.mxu0
      %v1933 = vadd.f32 %v1844, %v1932
      %v1934 = vpop.f32.mrf.mxu0
      %v1935 = vadd.f32 %v1846, %v1934
      %1936 = vmatmul.bf16.gmra.mxu0 %v678
      %v1937 = vpop.f32.mrf.mxu0
      %v1938 = vadd.f32 %v1849, %v1937
      %v1939 = vpop.f32.mrf.mxu0
      %v1940 = vadd.f32 %v1851, %v1939
      %1941 = vmatmul.bf16.gmra.mxu0 %v681
      %v1942 = vpop.f32.mrf.mxu0
      %v1943 = vadd.f32 %v1854, %v1942
      %v1944 = vpop.f32.mrf.mxu0
      %v1945 = vadd.f32 %v1856, %v1944
      %1946 = vmatmul.bf16.gmra.mxu0 %v684
      %v1947 = vpop.f32.mrf.mxu0
      %v1948 = vadd.f32 %v1859, %v1947
      %v1949 = vpop.f32.mrf.mxu0
      %v1950 = vadd.f32 %v1861, %v1949
      %1951 = vmatmul.bf16.gmra.mxu0 %v687
      %v1952 = vpop.f32.mrf.mxu0
      %v1953 = vadd.f32 %v1864, %v1952
      %v1954 = vpop.f32.mrf.mxu0
      %v1955 = vadd.f32 %v1866, %v1954
      %1956 = vmatmul.bf16.gmra.mxu0 %v690
      %v1957 = vpop.f32.mrf.mxu0
      %v1958 = vadd.f32 %v1869, %v1957
      %v1959 = vpop.f32.mrf.mxu0
      %v1960 = vadd.f32 %v1871, %v1959
      %1961 = vmatmul.bf16.gmra.mxu0 %v693
      %v1962 = vpop.f32.mrf.mxu0
      %v1963 = vadd.f32 %v1874, %v1962
      %v1964 = vpop.f32.mrf.mxu0
      %v1965 = vadd.f32 %v1876, %v1964
      %1966 = vdwg.mxu0
      %1967 = vmatpush.bf16.xpose.msra.mxu0 %v1134
      %1968 = vmatpush.bf16.xpose.msra.mxu0 %v1131
      %1969 = vmatpush.bf16.xpose.msra.mxu0 %v1128
      %1970 = vmatpush.bf16.xpose.msra.mxu0 %v1125
      %1971 = vmatpush.bf16.xpose.msra.mxu0 %v1122
      %1972 = vmatpush.bf16.xpose.msra.mxu0 %v1119
      %1973 = vmatpush.bf16.xpose.msra.mxu0 %v1116
      %1974 = vmatpush.bf16.xpose.msra.mxu0 %v1113
      %1975 = vmatmul.bf16.gmra.mxu0 %v649
      %v1976 = vpop.f32.mrf.mxu0
      %v1977 = vadd.f32 %v1888, %v1976
      %v1978 = vpop.f32.mrf.mxu0
      %v1979 = vadd.f32 %v1890, %v1978
      %1980 = vmatmul.bf16.gmra.mxu0 %v652
      %v1981 = vpop.f32.mrf.mxu0
      %v1982 = vadd.f32 %v1893, %v1981
      %v1983 = vpop.f32.mrf.mxu0
      %v1984 = vadd.f32 %v1895, %v1983
      %1985 = vmatmul.bf16.gmra.mxu0 %v655
      %v1986 = vpop.f32.mrf.mxu0
      %v1987 = vadd.f32 %v1898, %v1986
      %v1988 = vpop.f32.mrf.mxu0
      %v1989 = vadd.f32 %v1900, %v1988
      %1990 = vmatmul.bf16.gmra.mxu0 %v658
      %v1991 = vpop.f32.mrf.mxu0
      %v1992 = vadd.f32 %v1903, %v1991
      %v1993 = vpop.f32.mrf.mxu0
      %v1994 = vadd.f32 %v1905, %v1993
      %1995 = vmatmul.bf16.gmra.mxu0 %v661
      %v1996 = vpop.f32.mrf.mxu0
      %v1997 = vadd.f32 %v1908, %v1996
      %v1998 = vpop.f32.mrf.mxu0
      %v1999 = vadd.f32 %v1910, %v1998
      %2000 = vmatmul.bf16.gmra.mxu0 %v664
      %v2001 = vpop.f32.mrf.mxu0
      %v2002 = vadd.f32 %v1913, %v2001
      %v2003 = vpop.f32.mrf.mxu0
      %v2004 = vadd.f32 %v1915, %v2003
      %2005 = vmatmul.bf16.gmra.mxu0 %v667
      %v2006 = vpop.f32.mrf.mxu0
      %v2007 = vadd.f32 %v1918, %v2006
      %v2008 = vpop.f32.mrf.mxu0
      %v2009 = vadd.f32 %v1920, %v2008
      %2010 = vmatmul.bf16.gmra.mxu0 %v670
      %v2011 = vpop.f32.mrf.mxu0
      %v2012 = vadd.f32 %v1923, %v2011
      %v2013 = vpop.f32.mrf.mxu0
      %v2014 = vadd.f32 %v1925, %v2013
      %2015 = vmatmul.bf16.gmra.mxu0 %v673
      %v2016 = vpop.f32.mrf.mxu0
      %v2017 = vadd.f32 %v1928, %v2016
      %v2018 = vpop.f32.mrf.mxu0
      %v2019 = vadd.f32 %v1930, %v2018
      %2020 = vmatmul.bf16.gmra.mxu0 %v676
      %v2021 = vpop.f32.mrf.mxu0
      %v2022 = vadd.f32 %v1933, %v2021
      %v2023 = vpop.f32.mrf.mxu0
      %v2024 = vadd.f32 %v1935, %v2023
      %2025 = vmatmul.bf16.gmra.mxu0 %v679
      %v2026 = vpop.f32.mrf.mxu0
      %v2027 = vadd.f32 %v1938, %v2026
      %v2028 = vpop.f32.mrf.mxu0
      %v2029 = vadd.f32 %v1940, %v2028
      %2030 = vmatmul.bf16.gmra.mxu0 %v682
      %v2031 = vpop.f32.mrf.mxu0
      %v2032 = vadd.f32 %v1943, %v2031
      %v2033 = vpop.f32.mrf.mxu0
      %v2034 = vadd.f32 %v1945, %v2033
      %2035 = vmatmul.bf16.gmra.mxu0 %v685
      %v2036 = vpop.f32.mrf.mxu0
      %v2037 = vadd.f32 %v1948, %v2036
      %v2038 = vpop.f32.mrf.mxu0
      %v2039 = vadd.f32 %v1950, %v2038
      %2040 = vmatmul.bf16.gmra.mxu0 %v688
      %v2041 = vpop.f32.mrf.mxu0
      %v2042 = vadd.f32 %v1953, %v2041
      %v2043 = vpop.f32.mrf.mxu0
      %v2044 = vadd.f32 %v1955, %v2043
      %2045 = vmatmul.bf16.gmra.mxu0 %v691
      %v2046 = vpop.f32.mrf.mxu0
      %v2047 = vadd.f32 %v1958, %v2046
      %v2048 = vpop.f32.mrf.mxu0
      %v2049 = vadd.f32 %v1960, %v2048
      %2050 = vmatmul.bf16.gmra.mxu0 %v694
      %v2051 = vpop.f32.mrf.mxu0
      %v2052 = vadd.f32 %v1963, %v2051
      %v2053 = vpop.f32.mrf.mxu0
      %v2054 = vadd.f32 %v1965, %v2053
      %2055 = vdwg.mxu0
      %2056 = vmatpush.bf16.xpose.msra.mxu0 %v1156
      %2057 = vmatpush.bf16.xpose.msra.mxu0 %v1153
      %2058 = vmatpush.bf16.xpose.msra.mxu0 %v1150
      %2059 = vmatpush.bf16.xpose.msra.mxu0 %v1147
      %2060 = vmatpush.bf16.xpose.msra.mxu0 %v1144
      %2061 = vmatpush.bf16.xpose.msra.mxu0 %v1141
      %2062 = vmatpush.bf16.xpose.msra.mxu0 %v1138
      %2063 = vmatpush.bf16.xpose.msra.mxu0 %v1135
      %2064 = vmatmul.bf16.gmra.mxu0 %v647
      %v2065 = vpop.f32.mrf.mxu0
      %v2066 = vadd.f32 %v482, %v2065
      %v2067 = vpop.f32.mrf.mxu0
      %v2068 = vadd.f32 %v482, %v2067
      %2069 = vmatmul.bf16.gmra.mxu0 %v650
      %v2070 = vpop.f32.mrf.mxu0
      %v2071 = vadd.f32 %v482, %v2070
      %v2072 = vpop.f32.mrf.mxu0
      %v2073 = vadd.f32 %v482, %v2072
      %2074 = vmatmul.bf16.gmra.mxu0 %v653
      %v2075 = vpop.f32.mrf.mxu0
      %v2076 = vadd.f32 %v482, %v2075
      %v2077 = vpop.f32.mrf.mxu0
      %v2078 = vadd.f32 %v482, %v2077
      %2079 = vmatmul.bf16.gmra.mxu0 %v656
      %v2080 = vpop.f32.mrf.mxu0
      %v2081 = vadd.f32 %v482, %v2080
      %v2082 = vpop.f32.mrf.mxu0
      %v2083 = vadd.f32 %v482, %v2082
      %2084 = vmatmul.bf16.gmra.mxu0 %v659
      %v2085 = vpop.f32.mrf.mxu0
      %v2086 = vadd.f32 %v482, %v2085
      %v2087 = vpop.f32.mrf.mxu0
      %v2088 = vadd.f32 %v482, %v2087
      %2089 = vmatmul.bf16.gmra.mxu0 %v662
      %v2090 = vpop.f32.mrf.mxu0
      %v2091 = vadd.f32 %v482, %v2090
      %v2092 = vpop.f32.mrf.mxu0
      %v2093 = vadd.f32 %v482, %v2092
      %2094 = vmatmul.bf16.gmra.mxu0 %v665
      %v2095 = vpop.f32.mrf.mxu0
      %v2096 = vadd.f32 %v482, %v2095
      %v2097 = vpop.f32.mrf.mxu0
      %v2098 = vadd.f32 %v482, %v2097
      %2099 = vmatmul.bf16.gmra.mxu0 %v668
      %v2100 = vpop.f32.mrf.mxu0
      %v2101 = vadd.f32 %v482, %v2100
      %v2102 = vpop.f32.mrf.mxu0
      %v2103 = vadd.f32 %v482, %v2102
      %2104 = vmatmul.bf16.gmra.mxu0 %v671
      %v2105 = vpop.f32.mrf.mxu0
      %v2106 = vadd.f32 %v482, %v2105
      %v2107 = vpop.f32.mrf.mxu0
      %v2108 = vadd.f32 %v482, %v2107
      %2109 = vmatmul.bf16.gmra.mxu0 %v674
      %v2110 = vpop.f32.mrf.mxu0
      %v2111 = vadd.f32 %v482, %v2110
      %v2112 = vpop.f32.mrf.mxu0
      %v2113 = vadd.f32 %v482, %v2112
      %2114 = vmatmul.bf16.gmra.mxu0 %v677
      %v2115 = vpop.f32.mrf.mxu0
      %v2116 = vadd.f32 %v482, %v2115
      %v2117 = vpop.f32.mrf.mxu0
      %v2118 = vadd.f32 %v482, %v2117
      %2119 = vmatmul.bf16.gmra.mxu0 %v680
      %v2120 = vpop.f32.mrf.mxu0
      %v2121 = vadd.f32 %v482, %v2120
      %v2122 = vpop.f32.mrf.mxu0
      %v2123 = vadd.f32 %v482, %v2122
      %2124 = vmatmul.bf16.gmra.mxu0 %v683
      %v2125 = vpop.f32.mrf.mxu0
      %v2126 = vadd.f32 %v482, %v2125
      %v2127 = vpop.f32.mrf.mxu0
      %v2128 = vadd.f32 %v482, %v2127
      %2129 = vmatmul.bf16.gmra.mxu0 %v686
      %v2130 = vpop.f32.mrf.mxu0
      %v2131 = vadd.f32 %v482, %v2130
      %v2132 = vpop.f32.mrf.mxu0
      %v2133 = vadd.f32 %v482, %v2132
      %2134 = vmatmul.bf16.gmra.mxu0 %v689
      %v2135 = vpop.f32.mrf.mxu0
      %v2136 = vadd.f32 %v482, %v2135
      %v2137 = vpop.f32.mrf.mxu0
      %v2138 = vadd.f32 %v482, %v2137
      %2139 = vmatmul.bf16.gmra.mxu0 %v692
      %v2140 = vpop.f32.mrf.mxu0
      %v2141 = vadd.f32 %v482, %v2140
      %v2142 = vpop.f32.mrf.mxu0
      %v2143 = vadd.f32 %v482, %v2142
      %2144 = vdwg.mxu0
      %2145 = vmatpush.bf16.xpose.msra.mxu0 %v1157
      %2146 = vmatpush.bf16.xpose.msra.mxu0 %v1154
      %2147 = vmatpush.bf16.xpose.msra.mxu0 %v1151
      %2148 = vmatpush.bf16.xpose.msra.mxu0 %v1148
      %2149 = vmatpush.bf16.xpose.msra.mxu0 %v1145
      %2150 = vmatpush.bf16.xpose.msra.mxu0 %v1142
      %2151 = vmatpush.bf16.xpose.msra.mxu0 %v1139
      %2152 = vmatpush.bf16.xpose.msra.mxu0 %v1136
      %2153 = vmatmul.bf16.gmra.mxu0 %v648
      %v2154 = vpop.f32.mrf.mxu0
      %v2155 = vadd.f32 %v2066, %v2154
      %v2156 = vpop.f32.mrf.mxu0
      %v2157 = vadd.f32 %v2068, %v2156
      %2158 = vmatmul.bf16.gmra.mxu0 %v651
      %v2159 = vpop.f32.mrf.mxu0
      %v2160 = vadd.f32 %v2071, %v2159
      %v2161 = vpop.f32.mrf.mxu0
      %v2162 = vadd.f32 %v2073, %v2161
      %2163 = vmatmul.bf16.gmra.mxu0 %v654
      %v2164 = vpop.f32.mrf.mxu0
      %v2165 = vadd.f32 %v2076, %v2164
      %v2166 = vpop.f32.mrf.mxu0
      %v2167 = vadd.f32 %v2078, %v2166
      %2168 = vmatmul.bf16.gmra.mxu0 %v657
      %v2169 = vpop.f32.mrf.mxu0
      %v2170 = vadd.f32 %v2081, %v2169
      %v2171 = vpop.f32.mrf.mxu0
      %v2172 = vadd.f32 %v2083, %v2171
      %2173 = vmatmul.bf16.gmra.mxu0 %v660
      %v2174 = vpop.f32.mrf.mxu0
      %v2175 = vadd.f32 %v2086, %v2174
      %v2176 = vpop.f32.mrf.mxu0
      %v2177 = vadd.f32 %v2088, %v2176
      %2178 = vmatmul.bf16.gmra.mxu0 %v663
      %v2179 = vpop.f32.mrf.mxu0
      %v2180 = vadd.f32 %v2091, %v2179
      %v2181 = vpop.f32.mrf.mxu0
      %v2182 = vadd.f32 %v2093, %v2181
      %2183 = vmatmul.bf16.gmra.mxu0 %v666
      %v2184 = vpop.f32.mrf.mxu0
      %v2185 = vadd.f32 %v2096, %v2184
      %v2186 = vpop.f32.mrf.mxu0
      %v2187 = vadd.f32 %v2098, %v2186
      %2188 = vmatmul.bf16.gmra.mxu0 %v669
      %v2189 = vpop.f32.mrf.mxu0
      %v2190 = vadd.f32 %v2101, %v2189
      %v2191 = vpop.f32.mrf.mxu0
      %v2192 = vadd.f32 %v2103, %v2191
      %2193 = vmatmul.bf16.gmra.mxu0 %v672
      %v2194 = vpop.f32.mrf.mxu0
      %v2195 = vadd.f32 %v2106, %v2194
      %v2196 = vpop.f32.mrf.mxu0
      %v2197 = vadd.f32 %v2108, %v2196
      %2198 = vmatmul.bf16.gmra.mxu0 %v675
      %v2199 = vpop.f32.mrf.mxu0
      %v2200 = vadd.f32 %v2111, %v2199
      %v2201 = vpop.f32.mrf.mxu0
      %v2202 = vadd.f32 %v2113, %v2201
      %2203 = vmatmul.bf16.gmra.mxu0 %v678
      %v2204 = vpop.f32.mrf.mxu0
      %v2205 = vadd.f32 %v2116, %v2204
      %v2206 = vpop.f32.mrf.mxu0
      %v2207 = vadd.f32 %v2118, %v2206
      %2208 = vmatmul.bf16.gmra.mxu0 %v681
      %v2209 = vpop.f32.mrf.mxu0
      %v2210 = vadd.f32 %v2121, %v2209
      %v2211 = vpop.f32.mrf.mxu0
      %v2212 = vadd.f32 %v2123, %v2211
      %2213 = vmatmul.bf16.gmra.mxu0 %v684
      %v2214 = vpop.f32.mrf.mxu0
      %v2215 = vadd.f32 %v2126, %v2214
      %v2216 = vpop.f32.mrf.mxu0
      %v2217 = vadd.f32 %v2128, %v2216
      %2218 = vmatmul.bf16.gmra.mxu0 %v687
      %v2219 = vpop.f32.mrf.mxu0
      %v2220 = vadd.f32 %v2131, %v2219
      %v2221 = vpop.f32.mrf.mxu0
      %v2222 = vadd.f32 %v2133, %v2221
      %2223 = vmatmul.bf16.gmra.mxu0 %v690
      %v2224 = vpop.f32.mrf.mxu0
      %v2225 = vadd.f32 %v2136, %v2224
      %v2226 = vpop.f32.mrf.mxu0
      %v2227 = vadd.f32 %v2138, %v2226
      %2228 = vmatmul.bf16.gmra.mxu0 %v693
      %v2229 = vpop.f32.mrf.mxu0
      %v2230 = vadd.f32 %v2141, %v2229
      %v2231 = vpop.f32.mrf.mxu0
      %v2232 = vadd.f32 %v2143, %v2231
      %2233 = vdwg.mxu0
      %2234 = vmatpush.bf16.xpose.msra.mxu0 %v1158
      %2235 = vmatpush.bf16.xpose.msra.mxu0 %v1155
      %2236 = vmatpush.bf16.xpose.msra.mxu0 %v1152
      %2237 = vmatpush.bf16.xpose.msra.mxu0 %v1149
      %2238 = vmatpush.bf16.xpose.msra.mxu0 %v1146
      %2239 = vmatpush.bf16.xpose.msra.mxu0 %v1143
      %2240 = vmatpush.bf16.xpose.msra.mxu0 %v1140
      %2241 = vmatpush.bf16.xpose.msra.mxu0 %v1137
      %2242 = vmatmul.bf16.gmra.mxu0 %v649
      %v2243 = vpop.f32.mrf.mxu0
      %v2244 = vadd.f32 %v2155, %v2243
      %v2245 = vpop.f32.mrf.mxu0
      %v2246 = vadd.f32 %v2157, %v2245
      %2247 = vmatmul.bf16.gmra.mxu0 %v652
      %v2248 = vpop.f32.mrf.mxu0
      %v2249 = vadd.f32 %v2160, %v2248
      %v2250 = vpop.f32.mrf.mxu0
      %v2251 = vadd.f32 %v2162, %v2250
      %2252 = vmatmul.bf16.gmra.mxu0 %v655
      %v2253 = vpop.f32.mrf.mxu0
      %v2254 = vadd.f32 %v2165, %v2253
      %v2255 = vpop.f32.mrf.mxu0
      %v2256 = vadd.f32 %v2167, %v2255
      %2257 = vmatmul.bf16.gmra.mxu0 %v658
      %v2258 = vpop.f32.mrf.mxu0
      %v2259 = vadd.f32 %v2170, %v2258
      %v2260 = vpop.f32.mrf.mxu0
      %v2261 = vadd.f32 %v2172, %v2260
      %2262 = vmatmul.bf16.gmra.mxu0 %v661
      %v2263 = vpop.f32.mrf.mxu0
      %v2264 = vadd.f32 %v2175, %v2263
      %v2265 = vpop.f32.mrf.mxu0
      %v2266 = vadd.f32 %v2177, %v2265
      %2267 = vmatmul.bf16.gmra.mxu0 %v664
      %v2268 = vpop.f32.mrf.mxu0
      %v2269 = vadd.f32 %v2180, %v2268
      %v2270 = vpop.f32.mrf.mxu0
      %v2271 = vadd.f32 %v2182, %v2270
      %2272 = vmatmul.bf16.gmra.mxu0 %v667
      %v2273 = vpop.f32.mrf.mxu0
      %v2274 = vadd.f32 %v2185, %v2273
      %v2275 = vpop.f32.mrf.mxu0
      %v2276 = vadd.f32 %v2187, %v2275
      %2277 = vmatmul.bf16.gmra.mxu0 %v670
      %v2278 = vpop.f32.mrf.mxu0
      %v2279 = vadd.f32 %v2190, %v2278
      %v2280 = vpop.f32.mrf.mxu0
      %v2281 = vadd.f32 %v2192, %v2280
      %2282 = vmatmul.bf16.gmra.mxu0 %v673
      %v2283 = vpop.f32.mrf.mxu0
      %v2284 = vadd.f32 %v2195, %v2283
      %v2285 = vpop.f32.mrf.mxu0
      %v2286 = vadd.f32 %v2197, %v2285
      %2287 = vmatmul.bf16.gmra.mxu0 %v676
      %v2288 = vpop.f32.mrf.mxu0
      %v2289 = vadd.f32 %v2200, %v2288
      %v2290 = vpop.f32.mrf.mxu0
      %v2291 = vadd.f32 %v2202, %v2290
      %2292 = vmatmul.bf16.gmra.mxu0 %v679
      %v2293 = vpop.f32.mrf.mxu0
      %v2294 = vadd.f32 %v2205, %v2293
      %v2295 = vpop.f32.mrf.mxu0
      %v2296 = vadd.f32 %v2207, %v2295
      %2297 = vmatmul.bf16.gmra.mxu0 %v682
      %v2298 = vpop.f32.mrf.mxu0
      %v2299 = vadd.f32 %v2210, %v2298
      %v2300 = vpop.f32.mrf.mxu0
      %v2301 = vadd.f32 %v2212, %v2300
      %2302 = vmatmul.bf16.gmra.mxu0 %v685
      %v2303 = vpop.f32.mrf.mxu0
      %v2304 = vadd.f32 %v2215, %v2303
      %v2305 = vpop.f32.mrf.mxu0
      %v2306 = vadd.f32 %v2217, %v2305
      %2307 = vmatmul.bf16.gmra.mxu0 %v688
      %v2308 = vpop.f32.mrf.mxu0
      %v2309 = vadd.f32 %v2220, %v2308
      %v2310 = vpop.f32.mrf.mxu0
      %v2311 = vadd.f32 %v2222, %v2310
      %2312 = vmatmul.bf16.gmra.mxu0 %v691
      %v2313 = vpop.f32.mrf.mxu0
      %v2314 = vadd.f32 %v2225, %v2313
      %v2315 = vpop.f32.mrf.mxu0
      %v2316 = vadd.f32 %v2227, %v2315
      %2317 = vmatmul.bf16.gmra.mxu0 %v694
      %v2318 = vpop.f32.mrf.mxu0
      %v2319 = vadd.f32 %v2230, %v2318
      %v2320 = vpop.f32.mrf.mxu0
      %v2321 = vadd.f32 %v2232, %v2320
      %2322 = vdwg.mxu0
      %2323 = vst [vmem:[%s282] sm:$0xff] %v1443
      %2324 = vst [vmem:[%s282 + $0x8] sm:$0xff] %v1710
      %2325 = vst [vmem:[%s282 + $0x10] sm:$0xff] %v1977
      %2326 = vst [vmem:[%s282 + $0x18] sm:$0xff] %v2244
      %2327 = vst [vmem:[%s282 + $0x20] sm:$0xff] %v1445
      %2328 = vst [vmem:[%s282 + $0x28] sm:$0xff] %v1712
      %2329 = vst [vmem:[%s282 + $0x30] sm:$0xff] %v1979
      %2330 = vst [vmem:[%s282 + $0x38] sm:$0xff] %v2246
      %2331 = vst [vmem:[%s282 + $0x40] sm:$0xff] %v1448
      %2332 = vst [vmem:[%s282 + $0x48] sm:$0xff] %v1715
      %2333 = vst [vmem:[%s282 + $0x50] sm:$0xff] %v1982
      %2334 = vst [vmem:[%s282 + $0x58] sm:$0xff] %v2249
      %2335 = vst [vmem:[%s282 + $0x60] sm:$0xff] %v1450
      %2336 = vst [vmem:[%s282 + $0x68] sm:$0xff] %v1717
      %2337 = vst [vmem:[%s282 + $0x70] sm:$0xff] %v1984
      %2338 = vst [vmem:[%s282 + $0x78] sm:$0xff] %v2251
      %2339 = vst [vmem:[%s282 + $0x80] sm:$0xff] %v1453
      %2340 = vst [vmem:[%s282 + $0x88] sm:$0xff] %v1720
      %2341 = vst [vmem:[%s282 + $0x90] sm:$0xff] %v1987
      %2342 = vst [vmem:[%s282 + $0x98] sm:$0xff] %v2254
      %2343 = vst [vmem:[%s282 + $0xa0] sm:$0xff] %v1455
      %2344 = vst [vmem:[%s282 + $0xa8] sm:$0xff] %v1722
      %2345 = vst [vmem:[%s282 + $0xb0] sm:$0xff] %v1989
      %2346 = vst [vmem:[%s282 + $0xb8] sm:$0xff] %v2256
      %2347 = vst [vmem:[%s282 + $0xc0] sm:$0xff] %v1458
      %2348 = vst [vmem:[%s282 + $0xc8] sm:$0xff] %v1725
      %2349 = vst [vmem:[%s282 + $0xd0] sm:$0xff] %v1992
      %2350 = vst [vmem:[%s282 + $0xd8] sm:$0xff] %v2259
      %2351 = vst [vmem:[%s282 + $0xe0] sm:$0xff] %v1460
      %2352 = vst [vmem:[%s282 + $0xe8] sm:$0xff] %v1727
      %2353 = vst [vmem:[%s282 + $0xf0] sm:$0xff] %v1994
      %2354 = vst [vmem:[%s282 + $0xf8] sm:$0xff] %v2261
      %2355 = vst [vmem:[%s282 + $0x100] sm:$0xff] %v1463
      %2356 = vst [vmem:[%s282 + $0x108] sm:$0xff] %v1730
      %2357 = vst [vmem:[%s282 + $0x110] sm:$0xff] %v1997
      %2358 = vst [vmem:[%s282 + $0x118] sm:$0xff] %v2264
      %2359 = vst [vmem:[%s282 + $0x120] sm:$0xff] %v1465
      %2360 = vst [vmem:[%s282 + $0x128] sm:$0xff] %v1732
      %2361 = vst [vmem:[%s282 + $0x130] sm:$0xff] %v1999
      %2362 = vst [vmem:[%s282 + $0x138] sm:$0xff] %v2266
      %2363 = vst [vmem:[%s282 + $0x140] sm:$0xff] %v1468
      %2364 = vst [vmem:[%s282 + $0x148] sm:$0xff] %v1735
      %2365 = vst [vmem:[%s282 + $0x150] sm:$0xff] %v2002
      %2366 = vst [vmem:[%s282 + $0x158] sm:$0xff] %v2269
      %2367 = vst [vmem:[%s282 + $0x160] sm:$0xff] %v1470
      %2368 = vst [vmem:[%s282 + $0x168] sm:$0xff] %v1737
      %2369 = vst [vmem:[%s282 + $0x170] sm:$0xff] %v2004
      %2370 = vst [vmem:[%s282 + $0x178] sm:$0xff] %v2271
      %2371 = vst [vmem:[%s282 + $0x180] sm:$0xff] %v1473
      %2372 = vst [vmem:[%s282 + $0x188] sm:$0xff] %v1740
      %2373 = vst [vmem:[%s282 + $0x190] sm:$0xff] %v2007
      %2374 = vst [vmem:[%s282 + $0x198] sm:$0xff] %v2274
      %2375 = vst [vmem:[%s282 + $0x1a0] sm:$0xff] %v1475
      %2376 = vst [vmem:[%s282 + $0x1a8] sm:$0xff] %v1742
      %2377 = vst [vmem:[%s282 + $0x1b0] sm:$0xff] %v2009
      %2378 = vst [vmem:[%s282 + $0x1b8] sm:$0xff] %v2276
      %2379 = vst [vmem:[%s282 + $0x1c0] sm:$0xff] %v1478
      %2380 = vst [vmem:[%s282 + $0x1c8] sm:$0xff] %v1745
      %2381 = vst [vmem:[%s282 + $0x1d0] sm:$0xff] %v2012
      %2382 = vst [vmem:[%s282 + $0x1d8] sm:$0xff] %v2279
      %2383 = vst [vmem:[%s282 + $0x1e0] sm:$0xff] %v1480
      %2384 = vst [vmem:[%s282 + $0x1e8] sm:$0xff] %v1747
      %2385 = vst [vmem:[%s282 + $0x1f0] sm:$0xff] %v2014
      %2386 = vst [vmem:[%s282 + $0x1f8] sm:$0xff] %v2281
      %2387 = vst [vmem:[%s282 + $0x200] sm:$0xff] %v1483
      %2388 = vst [vmem:[%s282 + $0x208] sm:$0xff] %v1750
      %2389 = vst [vmem:[%s282 + $0x210] sm:$0xff] %v2017
      %2390 = vst [vmem:[%s282 + $0x218] sm:$0xff] %v2284
      %2391 = vst [vmem:[%s282 + $0x220] sm:$0xff] %v1485
      %2392 = vst [vmem:[%s282 + $0x228] sm:$0xff] %v1752
      %2393 = vst [vmem:[%s282 + $0x230] sm:$0xff] %v2019
      %2394 = vst [vmem:[%s282 + $0x238] sm:$0xff] %v2286
      %2395 = vst [vmem:[%s282 + $0x240] sm:$0xff] %v1488
      %2396 = vst [vmem:[%s282 + $0x248] sm:$0xff] %v1755
      %2397 = vst [vmem:[%s282 + $0x250] sm:$0xff] %v2022
      %2398 = vst [vmem:[%s282 + $0x258] sm:$0xff] %v2289
      %2399 = vst [vmem:[%s282 + $0x260] sm:$0xff] %v1490
      %2400 = vst [vmem:[%s282 + $0x268] sm:$0xff] %v1757
      %2401 = vst [vmem:[%s282 + $0x270] sm:$0xff] %v2024
      %2402 = vst [vmem:[%s282 + $0x278] sm:$0xff] %v2291
      %2403 = vst [vmem:[%s282 + $0x280] sm:$0xff] %v1493
      %2404 = vst [vmem:[%s282 + $0x288] sm:$0xff] %v1760
      %2405 = vst [vmem:[%s282 + $0x290] sm:$0xff] %v2027
      %2406 = vst [vmem:[%s282 + $0x298] sm:$0xff] %v2294
      %2407 = vst [vmem:[%s282 + $0x2a0] sm:$0xff] %v1495
      %2408 = vst [vmem:[%s282 + $0x2a8] sm:$0xff] %v1762
      %2409 = vst [vmem:[%s282 + $0x2b0] sm:$0xff] %v2029
      %2410 = vst [vmem:[%s282 + $0x2b8] sm:$0xff] %v2296
      %2411 = vst [vmem:[%s282 + $0x2c0] sm:$0xff] %v1498
      %2412 = vst [vmem:[%s282 + $0x2c8] sm:$0xff] %v1765
      %2413 = vst [vmem:[%s282 + $0x2d0] sm:$0xff] %v2032
      %2414 = vst [vmem:[%s282 + $0x2d8] sm:$0xff] %v2299
      %2415 = vst [vmem:[%s282 + $0x2e0] sm:$0xff] %v1500
      %2416 = vst [vmem:[%s282 + $0x2e8] sm:$0xff] %v1767
      %2417 = vst [vmem:[%s282 + $0x2f0] sm:$0xff] %v2034
      %2418 = vst [vmem:[%s282 + $0x2f8] sm:$0xff] %v2301
      %2419 = vst [vmem:[%s282 + $0x300] sm:$0xff] %v1503
      %2420 = vst [vmem:[%s282 + $0x308] sm:$0xff] %v1770
      %2421 = vst [vmem:[%s282 + $0x310] sm:$0xff] %v2037
      %2422 = vst [vmem:[%s282 + $0x318] sm:$0xff] %v2304
      %2423 = vst [vmem:[%s282 + $0x320] sm:$0xff] %v1505
      %2424 = vst [vmem:[%s282 + $0x328] sm:$0xff] %v1772
      %2425 = vst [vmem:[%s282 + $0x330] sm:$0xff] %v2039
      %2426 = vst [vmem:[%s282 + $0x338] sm:$0xff] %v2306
      %2427 = vst [vmem:[%s282 + $0x340] sm:$0xff] %v1508
      %2428 = vst [vmem:[%s282 + $0x348] sm:$0xff] %v1775
      %2429 = vst [vmem:[%s282 + $0x350] sm:$0xff] %v2042
      %2430 = vst [vmem:[%s282 + $0x358] sm:$0xff] %v2309
      %2431 = vst [vmem:[%s282 + $0x360] sm:$0xff] %v1510
      %2432 = vst [vmem:[%s282 + $0x368] sm:$0xff] %v1777
      %2433 = vst [vmem:[%s282 + $0x370] sm:$0xff] %v2044
      %2434 = vst [vmem:[%s282 + $0x378] sm:$0xff] %v2311
      %2435 = vst [vmem:[%s282 + $0x380] sm:$0xff] %v1513
      %2436 = vst [vmem:[%s282 + $0x388] sm:$0xff] %v1780
      %2437 = vst [vmem:[%s282 + $0x390] sm:$0xff] %v2047
      %2438 = vst [vmem:[%s282 + $0x398] sm:$0xff] %v2314
      %2439 = vst [vmem:[%s282 + $0x3a0] sm:$0xff] %v1515
      %2440 = vst [vmem:[%s282 + $0x3a8] sm:$0xff] %v1782
      %2441 = vst [vmem:[%s282 + $0x3b0] sm:$0xff] %v2049
      %2442 = vst [vmem:[%s282 + $0x3b8] sm:$0xff] %v2316
      %2443 = vst [vmem:[%s282 + $0x3c0] sm:$0xff] %v1518
      %2444 = vst [vmem:[%s282 + $0x3c8] sm:$0xff] %v1785
      %2445 = vst [vmem:[%s282 + $0x3d0] sm:$0xff] %v2052
      %2446 = vst [vmem:[%s282 + $0x3d8] sm:$0xff] %v2319
      %2447 = vst [vmem:[%s282 + $0x3e0] sm:$0xff] %v1520
      %2448 = vst [vmem:[%s282 + $0x3e8] sm:$0xff] %v1787
      %2449 = vst [vmem:[%s282 + $0x3f0] sm:$0xff] %v2054
      %2450 = vst [vmem:[%s282 + $0x3f8] sm:$0xff] %v2321
      %s2451 = smul.u32 32, %s19
      %s2452 = smul.u32 4, %s20
      %p2453 = scmp.lt.s32.totalorder %s2451, 63
      %s2454 = scalar_select %p2453, %s2451, 63
      %p2455 = scmp.lt.s32.totalorder %s2452, 3
      %s2456 = scalar_select %p2455, %s2452, 3
      %s2457 = smul.addr %s2454, 4
      %s2458 = sadd.s32 %s2456, %s2457
      %s2459 = smul.addr %s2458, 8
      %s2460 = scalar_lea.vmem %s3, %s2459
      // Predicated region
      $region33: #{linear_pallas_forward.1} parent=31 // pred_check
        %p2461 = pneg %p135
      $region34: #{linear_pallas_forward.1} parent=31 // pred_check_branch
        %2463 = sbr.rel (%p2461) target = $region36
      $region35: #{linear_pallas_forward.1} parent=31 // pred_region
        %s2464 = smul.u32 32, %s19
        %s2465 = smul.u32 4, %s20
      $region36: #{linear_pallas_forward.1} parent=31 // pred_fallthru
        _
    $region32: #{linear_pallas_forward.1} parent=5 // pred_fallthru
      _
    %p2466 = scmp.le.s32.totalorder 2, %s9
    // Predicated region
    $region37: #{linear_pallas_forward.1} parent=5 // pred_check
      %p2467 = pneg %p2466
    $region38: #{linear_pallas_forward.1} parent=5 // pred_check_branch
      %2469 = sbr.rel (%p2467) target = $region40
    $region39: #{linear_pallas_forward.1} parent=5 // pred_region
      %s2470 = ssub.s32 %s9, 2
      // Predicated region
      $region41: #{linear_pallas_forward.1} parent=39 // pred_check
        %p2471 = pneg %p141
      $region42: #{linear_pallas_forward.1} parent=39 // pred_check_branch
        %2473 = sbr.rel (%p2471) target = $region44
      $region43: #{linear_pallas_forward.1} parent=39 // pred_region
        %s2474 = smul.u32 32, %s22
        %s2475 = smul.u32 4, %s23
        %p2476 = scmp.lt.s32.totalorder %s2474, 63
        %s2477 = scalar_select %p2476, %s2474, 63
        %p2478 = scmp.lt.s32.totalorder %s2475, 3
        %s2479 = scalar_select %p2478, %s2475, 3
        %s2480 = smul.addr %s2477, 4
        %s2481 = sadd.s32 %s2479, %s2480
        %s2482 = smul.addr %s2481, 8
        %s2483 = scalar_lea.vmem %s3, %s2482
      $region44: #{linear_pallas_forward.1} parent=39 // pred_fallthru
        _
    $region40: #{linear_pallas_forward.1} parent=5 // pred_fallthru
      _
  $region6: #{linear_pallas_forward.1} parent=0 // loop_footer
    %s13 = sadd.s32 1, %s9
  $region7: #{linear_pallas_forward.1} parent=0 // loop_footer_branch
    %8 = sbr.rel target = $region3
  $region8: #{linear_pallas_forward.1} parent=0 // loop_exit
    _

</llo_original>
